<compile_context>
chip_gen: v5e
topology: v5e:2x2
jax: 0.10.0
libtpu: 0.0.40
codegen_flags: <defaults>
</compile_context>

<pallas_src>
import functools

import jax
import jax.numpy as jnp
from jax import lax
from jax.experimental import pallas as pl
from jax.experimental.pallas import tpu as pltpu


def _round_up(x, m):
    return (x + m - 1) // m * m


_VMEM_SPEC = pl.BlockSpec(memory_space=pltpu.MemorySpace.VMEM)


# ----------------------------------------------------------------------------
# Pallas kernels
# ----------------------------------------------------------------------------

def _down_kernel(Wi, M, x_ref, w_ref, b_ref, o_ref):
    """Stride-1 2x2 conv over phase-decomposed channels == 4x4 stride-2 conv.

    x_ref: (C4, M + trail)   flattened (N, Hi, Wi) phase grid, channel-major, f32
    w_ref: (Cout, 4*C4)      tap-major weight slab, bf16
    b_ref: (Cout, 1)         f32
    o_ref: (Cout, M)         f32
    """
    x = x_ref[...].astype(jnp.bfloat16)                     # bf16 MXU operand
    offs = [0, 1, Wi, Wi + 1]                               # taps (a, b) in {0,1}^2
    cols = jnp.concatenate([x[:, o:o + M] for o in offs], axis=0)   # (4*C4, M) bf16
    out = jnp.dot(w_ref[...], cols, preferred_element_type=jnp.float32)
    o_ref[...] = (out + b_ref[...]).astype(o_ref.dtype)


def _res_stage_kernel(Wp, Mf, lead, n_blocks,
                      x_ref, m_ref, s1_ref, t1_ref, w3_ref, b3_ref,
                      s2_ref, t2_ref, w1_ref, b1_ref, o_ref, frame_ref):
    """A whole RepeatedResBlock stage, fused into one kernel.

    Frame layout: per-image zero-ringed (Hp, Wp) grid, all N images flattened
    on lanes, preceded by `lead` (multiple of 128) and followed by `trail`
    columns so every 3x3 tap is a static lane slice and the interior store is
    lane-aligned.

    x_ref : (C, Mtot)          initial frame (lead/trail/ring zeros), f32
    m_ref : (1, Mtot)          1.0 at interior pixels, 0.0 on ring/lead/trail
    s1/t1 : (nb, C, 1)         BN1 scale/shift (applied after ReLU), f32
    w3_ref: (nb, Cmid, 9*C)    tap-major 3x3 weight slabs, bf16
    b3_ref: (nb, Cmid, 1)      f32
    s2/t2 : (nb, Cmid, 1)      BN2 scale/shift, f32
    w1_ref: (nb, C, Cmid)      1x1 weights, bf16
    b1_ref: (nb, C, 1)         f32
    o_ref : (C, Mf)            interior columns of the final frame
    frame_ref: (C, Mtot) f32   VMEM scratch, resident across blocks
    """
    frame_ref[...] = x_ref[...]
    mask = m_ref[...]                                       # (1, Mtot) f32
    offs = [lead + dy * Wp + dx for dy in (-1, 0, 1) for dx in (-1, 0, 1)]

    # n_blocks is small and static -> unroll at trace time (full LLO visibility).
    for b in range(n_blocks):
        x = frame_ref[...]                                  # (C, Mtot) f32
        # bn1(relu(x)); masking outside the interior provides the conv zero pad.
        a1 = (jnp.maximum(x, 0.0) * s1_ref[b] + t1_ref[b]) * mask
        a1 = a1.astype(jnp.bfloat16)                        # bf16 before tap gather

        # 3x3 conv as ONE matmul: the 9 taps are contiguous lane slices.
        cols = jnp.concatenate([a1[:, o:o + Mf] for o in offs], axis=0)  # (9C, Mf)
        h = jnp.dot(w3_ref[b], cols, preferred_element_type=jnp.float32)
        h = h + b3_ref[b]                                   # (Cmid, Mf) f32

        # bn2(relu(.)), 1x1 conv (position-wise matmul), residual add.
        a2 = (jnp.maximum(h, 0.0) * s2_ref[b] + t2_ref[b]).astype(jnp.bfloat16)
        h1 = jnp.dot(w1_ref[b], a2, preferred_element_type=jnp.float32)
        h1 = h1 + b1_ref[b]                                 # (C, Mf) f32

        # Aligned interior-only store (lead % 128 == 0); lead/trail untouched.
        frame_ref[:, lead:lead + Mf] = x[:, lead:lead + Mf] + h1

    o_ref[...] = frame_ref[:, lead:lead + Mf]


# ----------------------------------------------------------------------------
# Wrappers (layout plumbing only; all compute happens in the kernels above)
# ----------------------------------------------------------------------------

def _down_pallas(xp, weight, bias):
    """4x4 stride-2 'valid' conv on an already fully padded input.

    xp:     (Cin, N, Hp, Wp)  channel-major, padding already applied
    weight: (Cout, Cin, 4, 4) PyTorch layout
    returns (Cout, N, Ho, Wo)
    """
    Cin, N, Hp, Wp = xp.shape
    Cout = weight.shape[0]
    Ho = (Hp - 4) // 2 + 1
    Wo = (Wp - 4) // 2 + 1
    Hi, Wi = Ho + 1, Wo + 1

    # Stride-2 phase (pixel-unshuffle) decomposition: 4 sub-images stacked on
    # the channel axis -> the strided conv becomes a stride-1 2x2 conv.
    phases = [xp[:, :, py:py + 2 * Hi:2, px:px + 2 * Wi:2]
              for py in (0, 1) for px in (0, 1)]
    xph = jnp.concatenate(phases, axis=0)                   # (4*Cin, N, Hi, Wi)
    C4 = 4 * Cin
    M = N * Hi * Wi
    trail = Wi + 1
    xflat = jnp.pad(xph.reshape(C4, M), ((0, 0), (0, trail)))

    # Weight slab: (Cout, Cin, ky, kx) -> (Cout, tap(a,b), phase(py,px), Cin), bf16.
    w6 = weight.reshape(Cout, Cin, 2, 2, 2, 2)              # (co, ci, a, py, b, px)
    wslab = jnp.transpose(w6, (0, 2, 4, 3, 5, 1)).reshape(Cout, 4 * C4)
    wslab = wslab.astype(jnp.bfloat16)
    b2 = bias.reshape(Cout, 1)

    out = pl.pallas_call(
        functools.partial(_down_kernel, Wi, M),
        out_shape=jax.ShapeDtypeStruct((Cout, M), jnp.float32),
        in_specs=[_VMEM_SPEC] * 3,
        out_specs=_VMEM_SPEC,
    )(xflat, wslab, b2)

    out = out.reshape(Cout, N, Hi, Wi)[:, :, :Ho, :Wo]      # drop garbage row/col
    return out


def _bn_scale_shift(bn, eps=1e-5):
    scale = bn["gamma"] / jnp.sqrt(bn["var"] + eps)
    shift = bn["beta"] - bn["mean"] * scale
    return scale.reshape(-1, 1), shift.reshape(-1, 1)


def _stack_block_params(blocks, C):
    """Stack per-block parameters along a leading n_blocks axis."""
    s1, t1, s2, t2, w3, b3, w1, b1 = [], [], [], [], [], [], [], []
    for blk in blocks:
        a, b = _bn_scale_shift(blk["bn1"]); s1.append(a); t1.append(b)
        a, b = _bn_scale_shift(blk["bn2"]); s2.append(a); t2.append(b)
        Cmid = blk["w3"].shape[0]
        # (Cmid, C, 3, 3) -> (Cmid, ky, kx, C) -> (Cmid, 9C), tap-major.
        w3.append(jnp.transpose(blk["w3"], (0, 2, 3, 1)).reshape(Cmid, 9 * C))
        b3.append(blk["b3"].reshape(Cmid, 1))
        w1.append(blk["w1"].reshape(C, Cmid))
        b1.append(blk["b1"].reshape(C, 1))
    st = lambda xs: jnp.stack(xs, axis=0)
    return (st(s1), st(t1), st(w3).astype(jnp.bfloat16), st(b3),
            st(s2), st(t2), st(w1).astype(jnp.bfloat16), st(b1))


def _resblock_stage_pallas(x, blocks):
    """Apply a RepeatedResBlock stage as ONE fused kernel.  x: (C, N, H, W)."""
    C, N, H, W = x.shape
    Hp, Wp = H + 2, W + 2
    Mf = N * Hp * Wp
    lead = _round_up(Wp + 1, 128)                           # lane-aligned interior
    Mtot = _round_up(lead + Mf + Wp + 1, 128)
    trail = Mtot - lead - Mf

    xpad = jnp.pad(x, ((0, 0), (0, 0), (1, 1), (1, 1)))     # storage frame (ring)
    buf = jnp.pad(xpad.reshape(C, Mf), ((0, 0), (lead, trail)))

    mask = jnp.zeros((N, Hp, Wp), jnp.float32)
    mask = mask.at[:, 1:1 + H, 1:1 + W].set(1.0)
    mask = jnp.pad(mask.reshape(1, Mf), ((0, 0), (lead, trail)))

    nb = len(blocks)
    s1, t1, w3, b3, s2, t2, w1, b1 = _stack_block_params(blocks, C)

    out = pl.pallas_call(
        functools.partial(_res_stage_kernel, Wp, Mf, lead, nb),
        out_shape=jax.ShapeDtypeStruct((C, Mf), jnp.float32),
        in_specs=[_VMEM_SPEC] * 10,
        out_specs=_VMEM_SPEC,
        scratch_shapes=[pltpu.VMEM((C, Mtot), jnp.float32)],
    )(buf, mask, s1, t1, w3, b3, s2, t2, w1, b1)

    out = out.reshape(C, N, Hp, Wp)
    return out[:, :, 1:1 + H, 1:1 + W]


@jax.jit
def encoder_forward_pallas(x_nchw, params):
    """Encoder.forward(x): (N, Cin, H, W) -> (N, channel, H//4, W//4)-ish."""
    x = jnp.transpose(x_nchw, (1, 0, 2, 3)).astype(jnp.float32)   # (Cin, N, H, W)

    # ReplicationPad2d((1,1,1,1))
    x = jnp.pad(x, ((0, 0), (0, 0), (1, 1), (1, 1)), mode="edge")
    # Down 1 (its zero padding of 1 is pre-applied here)
    x = jnp.pad(x, ((0, 0), (0, 0), (1, 1), (1, 1)))
    y = _down_pallas(x, *params["down1"])                   # (C/4, N, H1, W1)
    y = _resblock_stage_pallas(y, params["res1"])

    # Down 2
    y = jnp.pad(y, ((0, 0), (0, 0), (1, 1), (1, 1)))
    z = _down_pallas(y, *params["down2"])                   # (C, N, H2, W2)
    z = _resblock_stage_pallas(z, params["res2"])

    return jnp.transpose(z, (1, 0, 2, 3))                   # back to NCHW


# ----------------------------------------------------------------------------
# Pure-JAX f32 reference (same eval-mode semantics) for correctness checking
# ----------------------------------------------------------------------------

def _conv_ref(x, w, b, stride, pad):
    y = lax.conv_general_dilated(
        x, w, window_strides=(stride, stride),
        padding=((pad, pad), (pad, pad)),
        dimension_numbers=("NCHW", "OIHW", "NCHW"))
    return y + b.reshape(1, -1, 1, 1)


def _bn_ref(x, bn, eps=1e-5):
    g = bn["gamma"].reshape(1, -1, 1, 1)
    b = bn["beta"].reshape(1, -1, 1, 1)
    m = bn["mean"].reshape(1, -1, 1, 1)
    v = bn["var"].reshape(1, -1, 1, 1)
    return (x - m) / jnp.sqrt(v + eps) * g + b


def _resblock_ref(x, blk):
    h = jnp.maximum(x, 0.0)
    h = _bn_ref(h, blk["bn1"])
    h = _conv_ref(h, blk["w3"], blk["b3"], stride=1, pad=1)
    h = jnp.maximum(h, 0.0)
    h = _bn_ref(h, blk["bn2"])
    h = _conv_ref(h, blk["w1"], blk["b1"], stride=1, pad=0)
    return x + h


@jax.jit
def encoder_reference(x_nchw, params):
    x = jnp.pad(x_nchw, ((0, 0), (0, 0), (1, 1), (1, 1)), mode="edge")
    x = _conv_ref(x, *params["down1"], stride=2, pad=1)
    for blk in params["res1"]:
        x = _resblock_ref(x, blk)
    x = _conv_ref(x, *params["down2"], stride=2, pad=1)
    for blk in params["res2"]:
        x = _resblock_ref(x, blk)
    return x


# ----------------------------------------------------------------------------
# Parameter construction
# ----------------------------------------------------------------------------

def _conv_init(key, cout, cin, k):
    fan_in = cin * k * k
    bound = 1.0 / (fan_in ** 0.5)
    kw, kb = jax.random.split(key)
    w = jax.random.uniform(kw, (cout, cin, k, k), jnp.float32, -bound, bound)
    b = jax.random.uniform(kb, (cout,), jnp.float32, -bound, bound)
    return w, b


def _bn_init(key, c):
    k1, k2, k3, k4 = jax.random.split(key, 4)
    return dict(
        gamma=jax.random.uniform(k1, (c,), jnp.float32, 0.5, 1.5),
        beta=0.1 * jax.random.normal(k2, (c,), jnp.float32),
        mean=0.1 * jax.random.normal(k3, (c,), jnp.float32),
        var=jax.random.uniform(k4, (c,), jnp.float32, 0.5, 1.5),
    )


def _resblock_init(key, in_channel, channel):
    k1, k2, k3, k4 = jax.random.split(key, 4)
    w3, b3 = _conv_init(k1, channel, in_channel, 3)         # Conv2d(in, ch, 3, pad=1)
    w1, b1 = _conv_init(k2, in_channel, channel, 1)         # Conv2d(ch, in, 1)
    return dict(bn1=_bn_init(k3, in_channel), w3=w3, b3=b3,
                bn2=_bn_init(k4, channel), w1=w1, b1=b1)


def _init_params(key, in_channel, channel, res_block, res_channel):
    c4, r4 = channel // 4, res_channel // 4
    ks = jax.random.split(key, 2 * res_block + 2)
    params = {
        "down1": _conv_init(ks[0], c4, in_channel, 4),
        "res1": [_resblock_init(ks[1 + i], c4, r4) for i in range(res_block)],
        "down2": _conv_init(ks[1 + res_block], channel, c4, 4),
        "res2": [_resblock_init(ks[2 + res_block + i], channel, res_channel)
                 for i in range(res_block)],
    }
    return params


# ----------------------------------------------------------------------------

if __name__ == "__main__":
    N, in_channel, H, W = 2, 4, 16, 16
    channel, res_block, res_channel = 32, 2, 32

    key = jax.random.PRNGKey(0)
    kp, kx = jax.random.split(key)
    params = _init_params(kp, in_channel, channel, res_block, res_channel)
    x = jax.random.normal(kx, (N, in_channel, H, W), jnp.float32)

    out = jax.block_until_ready(encoder_forward_pallas(x, params))
    # 16 -> replication pad 18 -> Down 9 -> Down 4
    assert out.shape == (N, channel, 4, 4), out.shape

    ref = jax.block_until_ready(encoder_reference(x, params))
    assert out.shape == ref.shape
    # Tolerance accounts for bf16 MXU operands (f32 accumulation) vs the pure
    # f32 reference across the 2 Down + 4 ResBlock matmul chain.
    if not jnp.allclose(out, ref, atol=5e-2, rtol=5e-2):
        raise AssertionError(
            f"mismatch vs reference, max abs err {jnp.max(jnp.abs(out - ref))}")

    print("KERNEL_OK")
</pallas_src>

<mosaic_0001>
module attributes {stable_mosaic.version = 11 : i64} {
  func.func @_down_kernel(%arg0: memref<16x211xf32, #tpu.memory_space<vmem>>, %arg1: memref<8x64xbf16, #tpu.memory_space<vmem>>, %arg2: memref<8x1xf32, #tpu.memory_space<vmem>>, %arg3: memref<8x200xf32, #tpu.memory_space<vmem>>) attributes {dimension_semantics = [], scalar_prefetch = 0 : i64, scratch_operands = 0 : i64, tpu.core_type = #tpu.core_type<tc>} {
    %c0 = arith.constant 0 : index
    %c0_0 = arith.constant 0 : index
    %0 = vector.load %arg0[%c0, %c0_0] : memref<16x211xf32, #tpu.memory_space<vmem>>, vector<16x211xf32>
    %1 = arith.truncf %0 : vector<16x211xf32> to vector<16x211xbf16>
    %2 = vector.extract_strided_slice %1 {offsets = [0, 0], sizes = [16, 200], strides = [1, 1]} : vector<16x211xbf16> to vector<16x200xbf16>
    %3 = vector.extract_strided_slice %1 {offsets = [0, 1], sizes = [16, 200], strides = [1, 1]} : vector<16x211xbf16> to vector<16x200xbf16>
    %4 = vector.extract_strided_slice %1 {offsets = [0, 10], sizes = [16, 200], strides = [1, 1]} : vector<16x211xbf16> to vector<16x200xbf16>
    %5 = vector.extract_strided_slice %1 {offsets = [0, 11], sizes = [16, 200], strides = [1, 1]} : vector<16x211xbf16> to vector<16x200xbf16>
    %6 = tpu.concatenate %2, %3, %4, %5 in 0 : vector<16x200xbf16>, vector<16x200xbf16>, vector<16x200xbf16>, vector<16x200xbf16> -> vector<64x200xbf16>
    %c0_1 = arith.constant 0 : index
    %c0_2 = arith.constant 0 : index
    %7 = vector.load %arg1[%c0_1, %c0_2] : memref<8x64xbf16, #tpu.memory_space<vmem>>, vector<8x64xbf16>
    %cst = arith.constant dense<0.000000e+00> : vector<8x200xf32>
    %8 = tpu.matmul %7, %6, %cst {dimension_numbers = #tpu.dot_dimension_numbers<[1], [0], [0], [1], [0, 0, 1, 1], [], []>} : vector<8x64xbf16>, vector<64x200xbf16>, vector<8x200xf32> -> vector<8x200xf32>
    %c0_3 = arith.constant 0 : index
    %c0_4 = arith.constant 0 : index
    %9 = vector.load %arg2[%c0_3, %c0_4] : memref<8x1xf32, #tpu.memory_space<vmem>>, vector<8x1xf32>
    %10 = vector.broadcast %9 : vector<8x1xf32> to vector<8x200xf32>
    %11 = arith.addf %8, %10 : vector<8x200xf32>
    %c0_5 = arith.constant 0 : index
    %c0_6 = arith.constant 0 : index
    %12 = vector.load %arg3[%c0_5, %c0_6] : memref<8x200xf32, #tpu.memory_space<vmem>>, vector<8x200xf32>
    tpu.vector_store %arg3[%c0_5, %c0_6], %11 {strides = array<i32>} : memref<8x200xf32, #tpu.memory_space<vmem>>, vector<8x200xf32>,
    return
  }
}

module attributes {stable_mosaic.version = 11 : i64} {
  func.func @_res_stage_kernel(%arg0: memref<8x384xf32, #tpu.memory_space<vmem>>, %arg1: memref<1x384xf32, #tpu.memory_space<vmem>>, %arg2: memref<2x8x1xf32, #tpu.memory_space<vmem>>, %arg3: memref<2x8x1xf32, #tpu.memory_space<vmem>>, %arg4: memref<2x8x72xbf16, #tpu.memory_space<vmem>>, %arg5: memref<2x8x1xf32, #tpu.memory_space<vmem>>, %arg6: memref<2x8x1xf32, #tpu.memory_space<vmem>>, %arg7: memref<2x8x1xf32, #tpu.memory_space<vmem>>, %arg8: memref<2x8x8xbf16, #tpu.memory_space<vmem>>, %arg9: memref<2x8x1xf32, #tpu.memory_space<vmem>>, %arg10: memref<8x242xf32, #tpu.memory_space<vmem>>, %arg11: memref<8x384xf32, #tpu.memory_space<vmem>>) attributes {dimension_semantics = [], scalar_prefetch = 0 : i64, scratch_operands = 1 : i64, tpu.core_type = #tpu.core_type<tc>} {
    %c0 = arith.constant 0 : index
    %c0_0 = arith.constant 0 : index
    %0 = vector.load %arg0[%c0, %c0_0] : memref<8x384xf32, #tpu.memory_space<vmem>>, vector<8x384xf32>
    %c0_1 = arith.constant 0 : index
    %c0_2 = arith.constant 0 : index
    %1 = vector.load %arg11[%c0_1, %c0_2] : memref<8x384xf32, #tpu.memory_space<vmem>>, vector<8x384xf32>
    tpu.vector_store %arg11[%c0_1, %c0_2], %0 {strides = array<i32>} : memref<8x384xf32, #tpu.memory_space<vmem>>, vector<8x384xf32>,
    %c0_3 = arith.constant 0 : index
    %c0_4 = arith.constant 0 : index
    %2 = vector.load %arg1[%c0_3, %c0_4] : memref<1x384xf32, #tpu.memory_space<vmem>>, vector<1x384xf32>
    %c0_5 = arith.constant 0 : index
    %c0_6 = arith.constant 0 : index
    %3 = vector.load %arg11[%c0_5, %c0_6] : memref<8x384xf32, #tpu.memory_space<vmem>>, vector<8x384xf32>
    %cst = arith.constant 0.000000e+00 : f32
    %4 = vector.broadcast %cst : f32 to vector<8x384xf32>
    %5 = arith.maximumf %3, %4 : vector<8x384xf32>
    %c0_7 = arith.constant 0 : index
    %c0_8 = arith.constant 0 : index
    %c0_9 = arith.constant 0 : index
    %6 = vector.load %arg2[%c0_7, %c0_8, %c0_9] : memref<2x8x1xf32, #tpu.memory_space<vmem>>, vector<1x8x1xf32>
    %7 = vector.shape_cast %6 : vector<1x8x1xf32> to vector<8x1xf32>
    %8 = vector.broadcast %7 : vector<8x1xf32> to vector<8x384xf32>
    %9 = arith.mulf %5, %8 : vector<8x384xf32>
    %c0_10 = arith.constant 0 : index
    %c0_11 = arith.constant 0 : index
    %c0_12 = arith.constant 0 : index
    %10 = vector.load %arg3[%c0_10, %c0_11, %c0_12] : memref<2x8x1xf32, #tpu.memory_space<vmem>>, vector<1x8x1xf32>
    %11 = vector.shape_cast %10 : vector<1x8x1xf32> to vector<8x1xf32>
    %12 = vector.broadcast %11 : vector<8x1xf32> to vector<8x384xf32>
    %13 = arith.addf %9, %12 : vector<8x384xf32>
    %14 = vector.broadcast %2 : vector<1x384xf32> to vector<8x384xf32>
    %15 = arith.mulf %13, %14 : vector<8x384xf32>
    %16 = arith.truncf %15 : vector<8x384xf32> to vector<8x384xbf16>
    %17 = vector.extract_strided_slice %16 {offsets = [0, 116], sizes = [8, 242], strides = [1, 1]} : vector<8x384xbf16> to vector<8x242xbf16>
    %18 = vector.extract_strided_slice %16 {offsets = [0, 117], sizes = [8, 242], strides = [1, 1]} : vector<8x384xbf16> to vector<8x242xbf16>
    %19 = vector.extract_strided_slice %16 {offsets = [0, 118], sizes = [8, 242], strides = [1, 1]} : vector<8x384xbf16> to vector<8x242xbf16>
    %20 = vector.extract_strided_slice %16 {offsets = [0, 127], sizes = [8, 242], strides = [1, 1]} : vector<8x384xbf16> to vector<8x242xbf16>
    %21 = vector.extract_strided_slice %16 {offsets = [0, 128], sizes = [8, 242], strides = [1, 1]} : vector<8x384xbf16> to vector<8x242xbf16>
    %22 = vector.extract_strided_slice %16 {offsets = [0, 129], sizes = [8, 242], strides = [1, 1]} : vector<8x384xbf16> to vector<8x242xbf16>
    %23 = vector.extract_strided_slice %16 {offsets = [0, 138], sizes = [8, 242], strides = [1, 1]} : vector<8x384xbf16> to vector<8x242xbf16>
    %24 = vector.extract_strided_slice %16 {offsets = [0, 139], sizes = [8, 242], strides = [1, 1]} : vector<8x384xbf16> to vector<8x242xbf16>
    %25 = vector.extract_strided_slice %16 {offsets = [0, 140], sizes = [8, 242], strides = [1, 1]} : vector<8x384xbf16> to vector<8x242xbf16>
    %26 = tpu.concatenate %17, %18, %19, %20, %21, %22, %23, %24, %25 in 0 : vector<8x242xbf16>, vector<8x242xbf16>, vector<8x242xbf16>, vector<8x242xbf16>, vector<8x242xbf16>, vector<8x242xbf16>, vector<8x242xbf16>, vector<8x242xbf16>, vector<8x242xbf16> -> vector<72x242xbf16>
    %c0_13 = arith.constant 0 : index
    %c0_14 = arith.constant 0 : index
    %c0_15 = arith.constant 0 : index
    %27 = vector.load %arg4[%c0_13, %c0_14, %c0_15] : memref<2x8x72xbf16, #tpu.memory_space<vmem>>, vector<1x8x72xbf16>
    %28 = vector.shape_cast %27 : vector<1x8x72xbf16> to vector<8x72xbf16>
    %cst_16 = arith.constant dense<0.000000e+00> : vector<8x242xf32>
    %29 = tpu.matmul %28, %26, %cst_16 {dimension_numbers = #tpu.dot_dimension_numbers<[1], [0], [0], [1], [0, 0, 1, 1], [], []>} : vector<8x72xbf16>, vector<72x242xbf16>, vector<8x242xf32> -> vector<8x242xf32>
    %c0_17 = arith.constant 0 : index
    %c0_18 = arith.constant 0 : index
    %c0_19 = arith.constant 0 : index
    %30 = vector.load %arg5[%c0_17, %c0_18, %c0_19] : memref<2x8x1xf32, #tpu.memory_space<vmem>>, vector<1x8x1xf32>
    %31 = vector.shape_cast %30 : vector<1x8x1xf32> to vector<8x1xf32>
    %32 = vector.broadcast %31 : vector<8x1xf32> to vector<8x242xf32>
    %33 = arith.addf %29, %32 : vector<8x242xf32>
    %cst_20 = arith.constant 0.000000e+00 : f32
    %34 = vector.broadcast %cst_20 : f32 to vector<8x242xf32>
    %35 = arith.maximumf %33, %34 : vector<8x242xf32>
    %c0_21 = arith.constant 0 : index
    %c0_22 = arith.constant 0 : index
    %c0_23 = arith.constant 0 : index
    %36 = vector.load %arg6[%c0_21, %c0_22, %c0_23] : memref<2x8x1xf32, #tpu.memory_space<vmem>>, vector<1x8x1xf32>
    %37 = vector.shape_cast %36 : vector<1x8x1xf32> to vector<8x1xf32>
    %38 = vector.broadcast %37 : vector<8x1xf32> to vector<8x242xf32>
    %39 = arith.mulf %35, %38 : vector<8x242xf32>
    %c0_24 = arith.constant 0 : index
    %c0_25 = arith.constant 0 : index
    %c0_26 = arith.constant 0 : index
    %40 = vector.load %arg7[%c0_24, %c0_25, %c0_26] : memref<2x8x1xf32, #tpu.memory_space<vmem>>, vector<1x8x1xf32>
    %41 = vector.shape_cast %40 : vector<1x8x1xf32> to vector<8x1xf32>
    %42 = vector.broadcast %41 : vector<8x1xf32> to vector<8x242xf32>
    %43 = arith.addf %39, %42 : vector<8x242xf32>
    %44 = arith.truncf %43 : vector<8x242xf32> to vector<8x242xbf16>
    %c0_27 = arith.constant 0 : index
    %c0_28 = arith.constant 0 : index
    %c0_29 = arith.constant 0 : index
    %45 = vector.load %arg8[%c0_27, %c0_28, %c0_29] : memref<2x8x8xbf16, #tpu.memory_space<vmem>>, vector<1x8x8xbf16>
    %46 = vector.shape_cast %45 : vector<1x8x8xbf16> to vector<8x8xbf16>
    %cst_30 = arith.constant dense<0.000000e+00> : vector<8x242xf32>
    %47 = tpu.matmul %46, %44, %cst_30 {dimension_numbers = #tpu.dot_dimension_numbers<[1], [0], [0], [1], [0, 0, 1, 1], [], []>} : vector<8x8xbf16>, vector<8x242xbf16>, vector<8x242xf32> -> vector<8x242xf32>
    %c0_31 = arith.constant 0 : index
    %c0_32 = arith.constant 0 : index
    %c0_33 = arith.constant 0 : index
    %48 = vector.load %arg9[%c0_31, %c0_32, %c0_33] : memref<2x8x1xf32, #tpu.memory_space<vmem>>, vector<1x8x1xf32>
    %49 = vector.shape_cast %48 : vector<1x8x1xf32> to vector<8x1xf32>
    %50 = vector.broadcast %49 : vector<8x1xf32> to vector<8x242xf32>
    %51 = arith.addf %47, %50 : vector<8x242xf32>
    %52 = vector.extract_strided_slice %3 {offsets = [0, 128], sizes = [8, 242], strides = [1, 1]} : vector<8x384xf32> to vector<8x242xf32>
    %53 = arith.addf %52, %51 : vector<8x242xf32>
    %c0_34 = arith.constant 0 : index
    %c128 = arith.constant 128 : index
    %54 = vector.load %arg11[%c0_34, %c128] : memref<8x384xf32, #tpu.memory_space<vmem>>, vector<8x242xf32>
    tpu.vector_store %arg11[%c0_34, %c128], %53 {strides = array<i32>} : memref<8x384xf32, #tpu.memory_space<vmem>>, vector<8x242xf32>,
    %c0_35 = arith.constant 0 : index
    %c0_36 = arith.constant 0 : index
    %55 = vector.load %arg11[%c0_35, %c0_36] : memref<8x384xf32, #tpu.memory_space<vmem>>, vector<8x384xf32>
    %cst_37 = arith.constant 0.000000e+00 : f32
    %56 = vector.broadcast %cst_37 : f32 to vector<8x384xf32>
    %57 = arith.maximumf %55, %56 : vector<8x384xf32>
    %c1 = arith.constant 1 : index
    %c0_38 = arith.constant 0 : index
    %c0_39 = arith.constant 0 : index
    %58 = vector.load %arg2[%c1, %c0_38, %c0_39] : memref<2x8x1xf32, #tpu.memory_space<vmem>>, vector<1x8x1xf32>
    %59 = vector.shape_cast %58 : vector<1x8x1xf32> to vector<8x1xf32>
    %60 = vector.broadcast %59 : vector<8x1xf32> to vector<8x384xf32>
    %61 = arith.mulf %57, %60 : vector<8x384xf32>
    %c1_40 = arith.constant 1 : index
    %c0_41 = arith.constant 0 : index
    %c0_42 = arith.constant 0 : index
    %62 = vector.load %arg3[%c1_40, %c0_41, %c0_42] : memref<2x8x1xf32, #tpu.memory_space<vmem>>, vector<1x8x1xf32>
    %63 = vector.shape_cast %62 : vector<1x8x1xf32> to vector<8x1xf32>
    %64 = vector.broadcast %63 : vector<8x1xf32> to vector<8x384xf32>
    %65 = arith.addf %61, %64 : vector<8x384xf32>
    %66 = vector.broadcast %2 : vector<1x384xf32> to vector<8x384xf32>
    %67 = arith.mulf %65, %66 : vector<8x384xf32>
    %68 = arith.truncf %67 : vector<8x384xf32> to vector<8x384xbf16>
    %69 = vector.extract_strided_slice %68 {offsets = [0, 116], sizes = [8, 242], strides = [1, 1]} : vector<8x384xbf16> to vector<8x242xbf16>
    %70 = vector.extract_strided_slice %68 {offsets = [0, 117], sizes = [8, 242], strides = [1, 1]} : vector<8x384xbf16> to vector<8x242xbf16>
    %71 = vector.extract_strided_slice %68 {offsets = [0, 118], sizes = [8, 242], strides = [1, 1]} : vector<8x384xbf16> to vector<8x242xbf16>
    %72 = vector.extract_strided_slice %68 {offsets = [0, 127], sizes = [8, 242], strides = [1, 1]} : vector<8x384xbf16> to vector<8x242xbf16>
    %73 = vector.extract_strided_slice %68 {offsets = [0, 128], sizes = [8, 242], strides = [1, 1]} : vector<8x384xbf16> to vector<8x242xbf16>
    %74 = vector.extract_strided_slice %68 {offsets = [0, 129], sizes = [8, 242], strides = [1, 1]} : vector<8x384xbf16> to vector<8x242xbf16>
    %75 = vector.extract_strided_slice %68 {offsets = [0, 138], sizes = [8, 242], strides = [1, 1]} : vector<8x384xbf16> to vector<8x242xbf16>
    %76 = vector.extract_strided_slice %68 {offsets = [0, 139], sizes = [8, 242], strides = [1, 1]} : vector<8x384xbf16> to vector<8x242xbf16>
    %77 = vector.extract_strided_slice %68 {offsets = [0, 140], sizes = [8, 242], strides = [1, 1]} : vector<8x384xbf16> to vector<8x242xbf16>
    %78 = tpu.concatenate %69, %70, %71, %72, %73, %74, %75, %76, %77 in 0 : vector<8x242xbf16>, vector<8x242xbf16>, vector<8x242xbf16>, vector<8x242xbf16>, vector<8x242xbf16>, vector<8x242xbf16>, vector<8x242xbf16>, vector<8x242xbf16>, vector<8x242xbf16> -> vector<72x242xbf16>
    %c1_43 = arith.constant 1 : index
    %c0_44 = arith.constant 0 : index
    %c0_45 = arith.constant 0 : index
    %79 = vector.load %arg4[%c1_43, %c0_44, %c0_45] : memref<2x8x72xbf16, #tpu.memory_space<vmem>>, vector<1x8x72xbf16>
    %80 = vector.shape_cast %79 : vector<1x8x72xbf16> to vector<8x72xbf16>
    %cst_46 = arith.constant dense<0.000000e+00> : vector<8x242xf32>
    %81 = tpu.matmul %80, %78, %cst_46 {dimension_numbers = #tpu.dot_dimension_numbers<[1], [0], [0], [1], [0, 0, 1, 1], [], []>} : vector<8x72xbf16>, vector<72x242xbf16>, vector<8x242xf32> -> vector<8x242xf32>
    %c1_47 = arith.constant 1 : index
    %c0_48 = arith.constant 0 : index
    %c0_49 = arith.constant 0 : index
    %82 = vector.load %arg5[%c1_47, %c0_48, %c0_49] : memref<2x8x1xf32, #tpu.memory_space<vmem>>, vector<1x8x1xf32>
    %83 = vector.shape_cast %82 : vector<1x8x1xf32> to vector<8x1xf32>
    %84 = vector.broadcast %83 : vector<8x1xf32> to vector<8x242xf32>
    %85 = arith.addf %81, %84 : vector<8x242xf32>
    %cst_50 = arith.constant 0.000000e+00 : f32
    %86 = vector.broadcast %cst_50 : f32 to vector<8x242xf32>
    %87 = arith.maximumf %85, %86 : vector<8x242xf32>
    %c1_51 = arith.constant 1 : index
    %c0_52 = arith.constant 0 : index
    %c0_53 = arith.constant 0 : index
    %88 = vector.load %arg6[%c1_51, %c0_52, %c0_53] : memref<2x8x1xf32, #tpu.memory_space<vmem>>, vector<1x8x1xf32>
    %89 = vector.shape_cast %88 : vector<1x8x1xf32> to vector<8x1xf32>
    %90 = vector.broadcast %89 : vector<8x1xf32> to vector<8x242xf32>
    %91 = arith.mulf %87, %90 : vector<8x242xf32>
    %c1_54 = arith.constant 1 : index
    %c0_55 = arith.constant 0 : index
    %c0_56 = arith.constant 0 : index
    %92 = vector.load %arg7[%c1_54, %c0_55, %c0_56] : memref<2x8x1xf32, #tpu.memory_space<vmem>>, vector<1x8x1xf32>
    %93 = vector.shape_cast %92 : vector<1x8x1xf32> to vector<8x1xf32>
    %94 = vector.broadcast %93 : vector<8x1xf32> to vector<8x242xf32>
    %95 = arith.addf %91, %94 : vector<8x242xf32>
    %96 = arith.truncf %95 : vector<8x242xf32> to vector<8x242xbf16>
    %c1_57 = arith.constant 1 : index
    %c0_58 = arith.constant 0 : index
    %c0_59 = arith.constant 0 : index
    %97 = vector.load %arg8[%c1_57, %c0_58, %c0_59] : memref<2x8x8xbf16, #tpu.memory_space<vmem>>, vector<1x8x8xbf16>
    %98 = vector.shape_cast %97 : vector<1x8x8xbf16> to vector<8x8xbf16>
    %cst_60 = arith.constant dense<0.000000e+00> : vector<8x242xf32>
    %99 = tpu.matmul %98, %96, %cst_60 {dimension_numbers = #tpu.dot_dimension_numbers<[1], [0], [0], [1], [0, 0, 1, 1], [], []>} : vector<8x8xbf16>, vector<8x242xbf16>, vector<8x242xf32> -> vector<8x242xf32>
    %c1_61 = arith.constant 1 : index
    %c0_62 = arith.constant 0 : index
    %c0_63 = arith.constant 0 : index
    %100 = vector.load %arg9[%c1_61, %c0_62, %c0_63] : memref<2x8x1xf32, #tpu.memory_space<vmem>>, vector<1x8x1xf32>
    %101 = vector.shape_cast %100 : vector<1x8x1xf32> to vector<8x1xf32>
    %102 = vector.broadcast %101 : vector<8x1xf32> to vector<8x242xf32>
    %103 = arith.addf %99, %102 : vector<8x242xf32>
    %104 = vector.extract_strided_slice %55 {offsets = [0, 128], sizes = [8, 242], strides = [1, 1]} : vector<8x384xf32> to vector<8x242xf32>
    %105 = arith.addf %104, %103 : vector<8x242xf32>
    %c0_64 = arith.constant 0 : index
    %c128_65 = arith.constant 128 : index
    %106 = vector.load %arg11[%c0_64, %c128_65] : memref<8x384xf32, #tpu.memory_space<vmem>>, vector<8x242xf32>
    tpu.vector_store %arg11[%c0_64, %c128_65], %105 {strides = array<i32>} : memref<8x384xf32, #tpu.memory_space<vmem>>, vector<8x242xf32>,
    %c0_66 = arith.constant 0 : index
    %c128_67 = arith.constant 128 : index
    %107 = vector.load %arg11[%c0_66, %c128_67] : memref<8x384xf32, #tpu.memory_space<vmem>>, vector<8x242xf32>
    %c0_68 = arith.constant 0 : index
    %c0_69 = arith.constant 0 : index
    %108 = vector.load %arg10[%c0_68, %c0_69] : memref<8x242xf32, #tpu.memory_space<vmem>>, vector<8x242xf32>
    tpu.vector_store %arg10[%c0_68, %c0_69], %107 {strides = array<i32>} : memref<8x242xf32, #tpu.memory_space<vmem>>, vector<8x242xf32>,
    return
  }
}

module attributes {stable_mosaic.version = 11 : i64} {
  func.func @_down_kernel(%arg0: memref<32x56xf32, #tpu.memory_space<vmem>>, %arg1: memref<32x128xbf16, #tpu.memory_space<vmem>>, %arg2: memref<32x1xf32, #tpu.memory_space<vmem>>, %arg3: memref<32x50xf32, #tpu.memory_space<vmem>>) attributes {dimension_semantics = [], scalar_prefetch = 0 : i64, scratch_operands = 0 : i64, tpu.core_type = #tpu.core_type<tc>} {
    %c0 = arith.constant 0 : index
    %c0_0 = arith.constant 0 : index
    %0 = vector.load %arg0[%c0, %c0_0] : memref<32x56xf32, #tpu.memory_space<vmem>>, vector<32x56xf32>
    %1 = arith.truncf %0 : vector<32x56xf32> to vector<32x56xbf16>
    %2 = vector.extract_strided_slice %1 {offsets = [0, 0], sizes = [32, 50], strides = [1, 1]} : vector<32x56xbf16> to vector<32x50xbf16>
    %3 = vector.extract_strided_slice %1 {offsets = [0, 1], sizes = [32, 50], strides = [1, 1]} : vector<32x56xbf16> to vector<32x50xbf16>
    %4 = vector.extract_strided_slice %1 {offsets = [0, 5], sizes = [32, 50], strides = [1, 1]} : vector<32x56xbf16> to vector<32x50xbf16>
    %5 = vector.extract_strided_slice %1 {offsets = [0, 6], sizes = [32, 50], strides = [1, 1]} : vector<32x56xbf16> to vector<32x50xbf16>
    %6 = tpu.concatenate %2, %3, %4, %5 in 0 : vector<32x50xbf16>, vector<32x50xbf16>, vector<32x50xbf16>, vector<32x50xbf16> -> vector<128x50xbf16>
    %c0_1 = arith.constant 0 : index
    %c0_2 = arith.constant 0 : index
    %7 = vector.load %arg1[%c0_1, %c0_2] : memref<32x128xbf16, #tpu.memory_space<vmem>>, vector<32x128xbf16>
    %cst = arith.constant dense<0.000000e+00> : vector<32x50xf32>
    %8 = tpu.matmul %7, %6, %cst {dimension_numbers = #tpu.dot_dimension_numbers<[1], [0], [0], [1], [0, 0, 1, 1], [], []>} : vector<32x128xbf16>, vector<128x50xbf16>, vector<32x50xf32> -> vector<32x50xf32>
    %c0_3 = arith.constant 0 : index
    %c0_4 = arith.constant 0 : index
    %9 = vector.load %arg2[%c0_3, %c0_4] : memref<32x1xf32, #tpu.memory_space<vmem>>, vector<32x1xf32>
    %10 = vector.broadcast %9 : vector<32x1xf32> to vector<32x50xf32>
    %11 = arith.addf %8, %10 : vector<32x50xf32>
    %c0_5 = arith.constant 0 : index
    %c0_6 = arith.constant 0 : index
    %12 = vector.load %arg3[%c0_5, %c0_6] : memref<32x50xf32, #tpu.memory_space<vmem>>, vector<32x50xf32>
    tpu.vector_store %arg3[%c0_5, %c0_6], %11 {strides = array<i32>} : memref<32x50xf32, #tpu.memory_space<vmem>>, vector<32x50xf32>,
    return
  }
}

module attributes {stable_mosaic.version = 11 : i64} {
  func.func @_res_stage_kernel(%arg0: memref<32x256xf32, #tpu.memory_space<vmem>>, %arg1: memref<1x256xf32, #tpu.memory_space<vmem>>, %arg2: memref<2x32x1xf32, #tpu.memory_space<vmem>>, %arg3: memref<2x32x1xf32, #tpu.memory_space<vmem>>, %arg4: memref<2x32x288xbf16, #tpu.memory_space<vmem>>, %arg5: memref<2x32x1xf32, #tpu.memory_space<vmem>>, %arg6: memref<2x32x1xf32, #tpu.memory_space<vmem>>, %arg7: memref<2x32x1xf32, #tpu.memory_space<vmem>>, %arg8: memref<2x32x32xbf16, #tpu.memory_space<vmem>>, %arg9: memref<2x32x1xf32, #tpu.memory_space<vmem>>, %arg10: memref<32x72xf32, #tpu.memory_space<vmem>>, %arg11: memref<32x256xf32, #tpu.memory_space<vmem>>) attributes {dimension_semantics = [], scalar_prefetch = 0 : i64, scratch_operands = 1 : i64, tpu.core_type = #tpu.core_type<tc>} {
    %c0 = arith.constant 0 : index
    %c0_0 = arith.constant 0 : index
    %0 = vector.load %arg0[%c0, %c0_0] : memref<32x256xf32, #tpu.memory_space<vmem>>, vector<32x256xf32>
    %c0_1 = arith.constant 0 : index
    %c0_2 = arith.constant 0 : index
    %1 = vector.load %arg11[%c0_1, %c0_2] : memref<32x256xf32, #tpu.memory_space<vmem>>, vector<32x256xf32>
    tpu.vector_store %arg11[%c0_1, %c0_2], %0 {strides = array<i32>} : memref<32x256xf32, #tpu.memory_space<vmem>>, vector<32x256xf32>,
    %c0_3 = arith.constant 0 : index
    %c0_4 = arith.constant 0 : index
    %2 = vector.load %arg1[%c0_3, %c0_4] : memref<1x256xf32, #tpu.memory_space<vmem>>, vector<1x256xf32>
    %c0_5 = arith.constant 0 : index
    %c0_6 = arith.constant 0 : index
    %3 = vector.load %arg11[%c0_5, %c0_6] : memref<32x256xf32, #tpu.memory_space<vmem>>, vector<32x256xf32>
    %cst = arith.constant 0.000000e+00 : f32
    %4 = vector.broadcast %cst : f32 to vector<32x256xf32>
    %5 = arith.maximumf %3, %4 : vector<32x256xf32>
    %c0_7 = arith.constant 0 : index
    %c0_8 = arith.constant 0 : index
    %c0_9 = arith.constant 0 : index
    %6 = vector.load %arg2[%c0_7, %c0_8, %c0_9] : memref<2x32x1xf32, #tpu.memory_space<vmem>>, vector<1x32x1xf32>
    %7 = vector.shape_cast %6 : vector<1x32x1xf32> to vector<32x1xf32>
    %8 = vector.broadcast %7 : vector<32x1xf32> to vector<32x256xf32>
    %9 = arith.mulf %5, %8 : vector<32x256xf32>
    %c0_10 = arith.constant 0 : index
    %c0_11 = arith.constant 0 : index
    %c0_12 = arith.constant 0 : index
    %10 = vector.load %arg3[%c0_10, %c0_11, %c0_12] : memref<2x32x1xf32, #tpu.memory_space<vmem>>, vector<1x32x1xf32>
    %11 = vector.shape_cast %10 : vector<1x32x1xf32> to vector<32x1xf32>
    %12 = vector.broadcast %11 : vector<32x1xf32> to vector<32x256xf32>
    %13 = arith.addf %9, %12 : vector<32x256xf32>
    %14 = vector.broadcast %2 : vector<1x256xf32> to vector<32x256xf32>
    %15 = arith.mulf %13, %14 : vector<32x256xf32>
    %16 = arith.truncf %15 : vector<32x256xf32> to vector<32x256xbf16>
    %17 = vector.extract_strided_slice %16 {offsets = [0, 121], sizes = [32, 72], strides = [1, 1]} : vector<32x256xbf16> to vector<32x72xbf16>
    %18 = vector.extract_strided_slice %16 {offsets = [0, 122], sizes = [32, 72], strides = [1, 1]} : vector<32x256xbf16> to vector<32x72xbf16>
    %19 = vector.extract_strided_slice %16 {offsets = [0, 123], sizes = [32, 72], strides = [1, 1]} : vector<32x256xbf16> to vector<32x72xbf16>
    %20 = vector.extract_strided_slice %16 {offsets = [0, 127], sizes = [32, 72], strides = [1, 1]} : vector<32x256xbf16> to vector<32x72xbf16>
    %21 = vector.extract_strided_slice %16 {offsets = [0, 128], sizes = [32, 72], strides = [1, 1]} : vector<32x256xbf16> to vector<32x72xbf16>
    %22 = vector.extract_strided_slice %16 {offsets = [0, 129], sizes = [32, 72], strides = [1, 1]} : vector<32x256xbf16> to vector<32x72xbf16>
    %23 = vector.extract_strided_slice %16 {offsets = [0, 133], sizes = [32, 72], strides = [1, 1]} : vector<32x256xbf16> to vector<32x72xbf16>
    %24 = vector.extract_strided_slice %16 {offsets = [0, 134], sizes = [32, 72], strides = [1, 1]} : vector<32x256xbf16> to vector<32x72xbf16>
    %25 = vector.extract_strided_slice %16 {offsets = [0, 135], sizes = [32, 72], strides = [1, 1]} : vector<32x256xbf16> to vector<32x72xbf16>
    %26 = tpu.concatenate %17, %18, %19, %20, %21, %22, %23, %24, %25 in 0 : vector<32x72xbf16>, vector<32x72xbf16>, vector<32x72xbf16>, vector<32x72xbf16>, vector<32x72xbf16>, vector<32x72xbf16>, vector<32x72xbf16>, vector<32x72xbf16>, vector<32x72xbf16> -> vector<288x72xbf16>
    %c0_13 = arith.constant 0 : index
    %c0_14 = arith.constant 0 : index
    %c0_15 = arith.constant 0 : index
    %27 = vector.load %arg4[%c0_13, %c0_14, %c0_15] : memref<2x32x288xbf16, #tpu.memory_space<vmem>>, vector<1x32x288xbf16>
    %28 = vector.shape_cast %27 : vector<1x32x288xbf16> to vector<32x288xbf16>
    %cst_16 = arith.constant dense<0.000000e+00> : vector<32x72xf32>
    %29 = tpu.matmul %28, %26, %cst_16 {dimension_numbers = #tpu.dot_dimension_numbers<[1], [0], [0], [1], [0, 0, 1, 1], [], []>} : vector<32x288xbf16>, vector<288x72xbf16>, vector<32x72xf32> -> vector<32x72xf32>
    %c0_17 = arith.constant 0 : index
    %c0_18 = arith.constant 0 : index
    %c0_19 = arith.constant 0 : index
    %30 = vector.load %arg5[%c0_17, %c0_18, %c0_19] : memref<2x32x1xf32, #tpu.memory_space<vmem>>, vector<1x32x1xf32>
    %31 = vector.shape_cast %30 : vector<1x32x1xf32> to vector<32x1xf32>
    %32 = vector.broadcast %31 : vector<32x1xf32> to vector<32x72xf32>
    %33 = arith.addf %29, %32 : vector<32x72xf32>
    %cst_20 = arith.constant 0.000000e+00 : f32
    %34 = vector.broadcast %cst_20 : f32 to vector<32x72xf32>
    %35 = arith.maximumf %33, %34 : vector<32x72xf32>
    %c0_21 = arith.constant 0 : index
    %c0_22 = arith.constant 0 : index
    %c0_23 = arith.constant 0 : index
    %36 = vector.load %arg6[%c0_21, %c0_22, %c0_23] : memref<2x32x1xf32, #tpu.memory_space<vmem>>, vector<1x32x1xf32>
    %37 = vector.shape_cast %36 : vector<1x32x1xf32> to vector<32x1xf32>
    %38 = vector.broadcast %37 : vector<32x1xf32> to vector<32x72xf32>
    %39 = arith.mulf %35, %38 : vector<32x72xf32>
    %c0_24 = arith.constant 0 : index
    %c0_25 = arith.constant 0 : index
    %c0_26 = arith.constant 0 : index
    %40 = vector.load %arg7[%c0_24, %c0_25, %c0_26] : memref<2x32x1xf32, #tpu.memory_space<vmem>>, vector<1x32x1xf32>
    %41 = vector.shape_cast %40 : vector<1x32x1xf32> to vector<32x1xf32>
    %42 = vector.broadcast %41 : vector<32x1xf32> to vector<32x72xf32>
    %43 = arith.addf %39, %42 : vector<32x72xf32>
    %44 = arith.truncf %43 : vector<32x72xf32> to vector<32x72xbf16>
    %c0_27 = arith.constant 0 : index
    %c0_28 = arith.constant 0 : index
    %c0_29 = arith.constant 0 : index
    %45 = vector.load %arg8[%c0_27, %c0_28, %c0_29] : memref<2x32x32xbf16, #tpu.memory_space<vmem>>, vector<1x32x32xbf16>
    %46 = vector.shape_cast %45 : vector<1x32x32xbf16> to vector<32x32xbf16>
    %cst_30 = arith.constant dense<0.000000e+00> : vector<32x72xf32>
    %47 = tpu.matmul %46, %44, %cst_30 {dimension_numbers = #tpu.dot_dimension_numbers<[1], [0], [0], [1], [0, 0, 1, 1], [], []>} : vector<32x32xbf16>, vector<32x72xbf16>, vector<32x72xf32> -> vector<32x72xf32>
    %c0_31 = arith.constant 0 : index
    %c0_32 = arith.constant 0 : index
    %c0_33 = arith.constant 0 : index
    %48 = vector.load %arg9[%c0_31, %c0_32, %c0_33] : memref<2x32x1xf32, #tpu.memory_space<vmem>>, vector<1x32x1xf32>
    %49 = vector.shape_cast %48 : vector<1x32x1xf32> to vector<32x1xf32>
    %50 = vector.broadcast %49 : vector<32x1xf32> to vector<32x72xf32>
    %51 = arith.addf %47, %50 : vector<32x72xf32>
    %52 = vector.extract_strided_slice %3 {offsets = [0, 128], sizes = [32, 72], strides = [1, 1]} : vector<32x256xf32> to vector<32x72xf32>
    %53 = arith.addf %52, %51 : vector<32x72xf32>
    %c0_34 = arith.constant 0 : index
    %c128 = arith.constant 128 : index
    %54 = vector.load %arg11[%c0_34, %c128] : memref<32x256xf32, #tpu.memory_space<vmem>>, vector<32x72xf32>
    tpu.vector_store %arg11[%c0_34, %c128], %53 {strides = array<i32>} : memref<32x256xf32, #tpu.memory_space<vmem>>, vector<32x72xf32>,
    %c0_35 = arith.constant 0 : index
    %c0_36 = arith.constant 0 : index
    %55 = vector.load %arg11[%c0_35, %c0_36] : memref<32x256xf32, #tpu.memory_space<vmem>>, vector<32x256xf32>
    %cst_37 = arith.constant 0.000000e+00 : f32
    %56 = vector.broadcast %cst_37 : f32 to vector<32x256xf32>
    %57 = arith.maximumf %55, %56 : vector<32x256xf32>
    %c1 = arith.constant 1 : index
    %c0_38 = arith.constant 0 : index
    %c0_39 = arith.constant 0 : index
    %58 = vector.load %arg2[%c1, %c0_38, %c0_39] : memref<2x32x1xf32, #tpu.memory_space<vmem>>, vector<1x32x1xf32>
    %59 = vector.shape_cast %58 : vector<1x32x1xf32> to vector<32x1xf32>
    %60 = vector.broadcast %59 : vector<32x1xf32> to vector<32x256xf32>
    %61 = arith.mulf %57, %60 : vector<32x256xf32>
    %c1_40 = arith.constant 1 : index
    %c0_41 = arith.constant 0 : index
    %c0_42 = arith.constant 0 : index
    %62 = vector.load %arg3[%c1_40, %c0_41, %c0_42] : memref<2x32x1xf32, #tpu.memory_space<vmem>>, vector<1x32x1xf32>
    %63 = vector.shape_cast %62 : vector<1x32x1xf32> to vector<32x1xf32>
    %64 = vector.broadcast %63 : vector<32x1xf32> to vector<32x256xf32>
    %65 = arith.addf %61, %64 : vector<32x256xf32>
    %66 = vector.broadcast %2 : vector<1x256xf32> to vector<32x256xf32>
    %67 = arith.mulf %65, %66 : vector<32x256xf32>
    %68 = arith.truncf %67 : vector<32x256xf32> to vector<32x256xbf16>
    %69 = vector.extract_strided_slice %68 {offsets = [0, 121], sizes = [32, 72], strides = [1, 1]} : vector<32x256xbf16> to vector<32x72xbf16>
    %70 = vector.extract_strided_slice %68 {offsets = [0, 122], sizes = [32, 72], strides = [1, 1]} : vector<32x256xbf16> to vector<32x72xbf16>
    %71 = vector.extract_strided_slice %68 {offsets = [0, 123], sizes = [32, 72], strides = [1, 1]} : vector<32x256xbf16> to vector<32x72xbf16>
    %72 = vector.extract_strided_slice %68 {offsets = [0, 127], sizes = [32, 72], strides = [1, 1]} : vector<32x256xbf16> to vector<32x72xbf16>
    %73 = vector.extract_strided_slice %68 {offsets = [0, 128], sizes = [32, 72], strides = [1, 1]} : vector<32x256xbf16> to vector<32x72xbf16>
    %74 = vector.extract_strided_slice %68 {offsets = [0, 129], sizes = [32, 72], strides = [1, 1]} : vector<32x256xbf16> to vector<32x72xbf16>
    %75 = vector.extract_strided_slice %68 {offsets = [0, 133], sizes = [32, 72], strides = [1, 1]} : vector<32x256xbf16> to vector<32x72xbf16>
    %76 = vector.extract_strided_slice %68 {offsets = [0, 134], sizes = [32, 72], strides = [1, 1]} : vector<32x256xbf16> to vector<32x72xbf16>
    %77 = vector.extract_strided_slice %68 {offsets = [0, 135], sizes = [32, 72], strides = [1, 1]} : vector<32x256xbf16> to vector<32x72xbf16>
    %78 = tpu.concatenate %69, %70, %71, %72, %73, %74, %75, %76, %77 in 0 : vector<32x72xbf16>, vector<32x72xbf16>, vector<32x72xbf16>, vector<32x72xbf16>, vector<32x72xbf16>, vector<32x72xbf16>, vector<32x72xbf16>, vector<32x72xbf16>, vector<32x72xbf16> -> vector<288x72xbf16>
    %c1_43 = arith.constant 1 : index
    %c0_44 = arith.constant 0 : index
    %c0_45 = arith.constant 0 : index
    %79 = vector.load %arg4[%c1_43, %c0_44, %c0_45] : memref<2x32x288xbf16, #tpu.memory_space<vmem>>, vector<1x32x288xbf16>
    %80 = vector.shape_cast %79 : vector<1x32x288xbf16> to vector<32x288xbf16>
    %cst_46 = arith.constant dense<0.000000e+00> : vector<32x72xf32>
    %81 = tpu.matmul %80, %78, %cst_46 {dimension_numbers = #tpu.dot_dimension_numbers<[1], [0], [0], [1], [0, 0, 1, 1], [], []>} : vector<32x288xbf16>, vector<288x72xbf16>, vector<32x72xf32> -> vector<32x72xf32>
    %c1_47 = arith.constant 1 : index
    %c0_48 = arith.constant 0 : index
    %c0_49 = arith.constant 0 : index
    %82 = vector.load %arg5[%c1_47, %c0_48, %c0_49] : memref<2x32x1xf32, #tpu.memory_space<vmem>>, vector<1x32x1xf32>
    %83 = vector.shape_cast %82 : vector<1x32x1xf32> to vector<32x1xf32>
    %84 = vector.broadcast %83 : vector<32x1xf32> to vector<32x72xf32>
    %85 = arith.addf %81, %84 : vector<32x72xf32>
    %cst_50 = arith.constant 0.000000e+00 : f32
    %86 = vector.broadcast %cst_50 : f32 to vector<32x72xf32>
    %87 = arith.maximumf %85, %86 : vector<32x72xf32>
    %c1_51 = arith.constant 1 : index
    %c0_52 = arith.constant 0 : index
    %c0_53 = arith.constant 0 : index
    %88 = vector.load %arg6[%c1_51, %c0_52, %c0_53] : memref<2x32x1xf32, #tpu.memory_space<vmem>>, vector<1x32x1xf32>
    %89 = vector.shape_cast %88 : vector<1x32x1xf32> to vector<32x1xf32>
    %90 = vector.broadcast %89 : vector<32x1xf32> to vector<32x72xf32>
    %91 = arith.mulf %87, %90 : vector<32x72xf32>
    %c1_54 = arith.constant 1 : index
    %c0_55 = arith.constant 0 : index
    %c0_56 = arith.constant 0 : index
    %92 = vector.load %arg7[%c1_54, %c0_55, %c0_56] : memref<2x32x1xf32, #tpu.memory_space<vmem>>, vector<1x32x1xf32>
    %93 = vector.shape_cast %92 : vector<1x32x1xf32> to vector<32x1xf32>
    %94 = vector.broadcast %93 : vector<32x1xf32> to vector<32x72xf32>
    %95 = arith.addf %91, %94 : vector<32x72xf32>
    %96 = arith.truncf %95 : vector<32x72xf32> to vector<32x72xbf16>
    %c1_57 = arith.constant 1 : index
    %c0_58 = arith.constant 0 : index
    %c0_59 = arith.constant 0 : index
    %97 = vector.load %arg8[%c1_57, %c0_58, %c0_59] : memref<2x32x32xbf16, #tpu.memory_space<vmem>>, vector<1x32x32xbf16>
    %98 = vector.shape_cast %97 : vector<1x32x32xbf16> to vector<32x32xbf16>
    %cst_60 = arith.constant dense<0.000000e+00> : vector<32x72xf32>
    %99 = tpu.matmul %98, %96, %cst_60 {dimension_numbers = #tpu.dot_dimension_numbers<[1], [0], [0], [1], [0, 0, 1, 1], [], []>} : vector<32x32xbf16>, vector<32x72xbf16>, vector<32x72xf32> -> vector<32x72xf32>
    %c1_61 = arith.constant 1 : index
    %c0_62 = arith.constant 0 : index
    %c0_63 = arith.constant 0 : index
    %100 = vector.load %arg9[%c1_61, %c0_62, %c0_63] : memref<2x32x1xf32, #tpu.memory_space<vmem>>, vector<1x32x1xf32>
    %101 = vector.shape_cast %100 : vector<1x32x1xf32> to vector<32x1xf32>
    %102 = vector.broadcast %101 : vector<32x1xf32> to vector<32x72xf32>
    %103 = arith.addf %99, %102 : vector<32x72xf32>
    %104 = vector.extract_strided_slice %55 {offsets = [0, 128], sizes = [32, 72], strides = [1, 1]} : vector<32x256xf32> to vector<32x72xf32>
    %105 = arith.addf %104, %103 : vector<32x72xf32>
    %c0_64 = arith.constant 0 : index
    %c128_65 = arith.constant 128 : index
    %106 = vector.load %arg11[%c0_64, %c128_65] : memref<32x256xf32, #tpu.memory_space<vmem>>, vector<32x72xf32>
    tpu.vector_store %arg11[%c0_64, %c128_65], %105 {strides = array<i32>} : memref<32x256xf32, #tpu.memory_space<vmem>>, vector<32x72xf32>,
    %c0_66 = arith.constant 0 : index
    %c128_67 = arith.constant 128 : index
    %107 = vector.load %arg11[%c0_66, %c128_67] : memref<32x256xf32, #tpu.memory_space<vmem>>, vector<32x72xf32>
    %c0_68 = arith.constant 0 : index
    %c0_69 = arith.constant 0 : index
    %108 = vector.load %arg10[%c0_68, %c0_69] : memref<32x72xf32, #tpu.memory_space<vmem>>, vector<32x72xf32>
    tpu.vector_store %arg10[%c0_68, %c0_69], %107 {strides = array<i32>} : memref<32x72xf32, #tpu.memory_space<vmem>>, vector<32x72xf32>,
    return
  }
}

</mosaic_0001>

<llo_original>
// kernel: encoder_forward_pallas.4
$region0: #{encoder_forward_pallas.4}
  #allocation0 [shape = 'u32[]', space=smem, size = 0x4, offset = 0x4, fixed_abs, tag = 'smem constant byte address 0x4 - core index']
  #allocation1 [shape = 'u32[72,128]{1,0:T(1,128)}', space=vmem, size = 0x9000, scoped, tag = 'internal scratch']
  %s0 = inlined_call_operand.vmem [shape: f32[16,211], index: 0, kind: input, shape index: {}]
  %s1 = inlined_call_operand.vmem [shape: bf16[8,64], index: 1, kind: input, shape index: {}]
  %s2 = inlined_call_operand.vmem [shape: f32[8,1], index: 2, kind: input, shape index: {}]
  %s3 = inlined_call_operand.vmem [shape: f32[8,200], index: 3, kind: output, shape index: {}]
  %s4 = sld [smem:[#allocation0]]
  $region22: #{encoder_forward_pallas.4} parent=0
    _
  %s6 = ssub.s32 1, %s4
  %s7 = scalar_select 0, %s6, %s4
  // Predicated region
  $region2: #{encoder_forward_pallas.4} parent=0 // pred_check
    _
  $region3: #{encoder_forward_pallas.4} parent=0 // pred_check_branch
    %9 = sbr.rel (0) target = $region5
  $region4: #{encoder_forward_pallas.4} parent=0 // pred_region
    _
  $region5: #{encoder_forward_pallas.4} parent=0 // pred_fallthru
    _
  // Predicated region
  $region6: #{encoder_forward_pallas.4} parent=0 // pred_check
    _
  $region7: #{encoder_forward_pallas.4} parent=0 // pred_check_branch
    %11 = sbr.rel (0) target = $region9
  $region8: #{encoder_forward_pallas.4} parent=0 // pred_region
    _
  $region9: #{encoder_forward_pallas.4} parent=0 // pred_fallthru
    _
  // Predicated region
  $region10: #{encoder_forward_pallas.4} parent=0 // pred_check
    _
  $region11: #{encoder_forward_pallas.4} parent=0 // pred_check_branch
    %13 = sbr.rel (0) target = $region13
  $region12: #{encoder_forward_pallas.4} parent=0 // pred_region
    _
  $region13: #{encoder_forward_pallas.4} parent=0 // pred_fallthru
    _
  %v15 = vld [vmem:[%s0] sm:$0xff]
  %v16 = vld [vmem:[%s0 + $0x8] sm:$0xff]
  %v17 = vld [vmem:[%s0 + $0x10] sm:$0xff]
  %v18 = vld [vmem:[%s0 + $0x18] sm:$0xff]
  %v19 = vpack.c.bf16 %v16, %v15
  %v20 = vpack.c.bf16 %v18, %v17
  %v23 = vunpack.c.l.b16 %v19
  %v24 = vunpack.c.h.b16 %v19
  %v25 = vunpack.c.l.b16 %v20
  %v26 = vunpack.c.h.b16 %v20
  %v27 = vpack.c.b16 %v25, %v23
  %v28 = vpack.c.b16 %v26, %v24
  %31 = vrot.lane.b32.xlu0 %v27, 127
  %v32 = vpop.permute.xlu0 %31
  %33 = vrot.lane.b32.xlu0 %v28, 127
  %v34 = vpop.permute.xlu0 %33
  %vm35 = vcmask 1039360
  %v36 = vsel %vm35, %v32, %v34
  %39 = vrot.lane.b32.xlu0 %v27, 118
  %v40 = vpop.permute.xlu0 %39
  %41 = vrot.lane.b32.xlu0 %v28, 118
  %v42 = vpop.permute.xlu0 %41
  %vm43 = vcmask 965632
  %v44 = vsel %vm43, %v40, %v42
  %47 = vrot.lane.b32.xlu0 %v27, 117
  %v48 = vpop.permute.xlu0 %47
  %49 = vrot.lane.b32.xlu0 %v28, 117
  %v50 = vpop.permute.xlu0 %49
  %vm51 = vcmask 957440
  %v52 = vsel %vm51, %v48, %v50
  %v55 = vld [vmem:[%s1] sm:$0xf]
  %v56 = vld [vmem:[%s2] sm:$0xff]
  %58 = vset.pattern.permute.xlu0 0
  %59 = vperm.xlu0 %58, %v56
  %v60 = vpop.permute.xlu0 %59
  %vm62 = vcmask 523264
  %v64 = vsel %vm62, %v55, 0
  %66 = vmatpush.bf16.msra.mxu0 0
  %67 = vmatpush.bf16.msra.mxu0 0
  %68 = vmatpush.bf16.msra.mxu0 0
  %69 = vmatpush.bf16.msra.mxu0 0
  %70 = vmatpush.bf16.msra.mxu0 %v52
  %71 = vmatpush.bf16.msra.mxu0 %v44
  %72 = vmatpush.bf16.msra.mxu0 %v36
  %73 = vmatpush.bf16.msra.mxu0 %v27
  %74 = vmatmul.bf16.gmra.mxu0 %v64
  %v75 = vpop.f32.mrf.mxu0
  %v76 = vadd.f32 %v60, %v75
  %v77 = vpop.f32.mrf.mxu0
  %78 = vdwg.mxu0
  %79 = vmatpush.bf16.msra.mxu0 0
  %80 = vmatpush.bf16.msra.mxu0 0
  %81 = vmatpush.bf16.msra.mxu0 0
  %82 = vmatpush.bf16.msra.mxu0 0
  %83 = vmatpush.bf16.msra.mxu0 %v50
  %84 = vmatpush.bf16.msra.mxu0 %v42
  %85 = vmatpush.bf16.msra.mxu0 %v34
  %86 = vmatpush.bf16.msra.mxu0 %v28
  %87 = vmatmul.bf16.gmra.mxu0 %v64
  %v88 = vpop.f32.mrf.mxu0
  %v89 = vadd.f32 %v60, %v88
  %v90 = vpop.f32.mrf.mxu0
  %91 = vdwg.mxu0
  %92 = vst [vmem:[%s3] sm:$0xff] %v76
  %vm93 = vcmask 588800
  %94 = vst.msk [vmem:[%s3 + $0x8] sm:$0xff] %vm93, %v89
  // Predicated region
  $region14: #{encoder_forward_pallas.4} parent=0 // pred_check
    _
  $region15: #{encoder_forward_pallas.4} parent=0 // pred_check_branch
    %96 = sbr.rel (0) target = $region17
  $region16: #{encoder_forward_pallas.4} parent=0 // pred_region
    _
  $region17: #{encoder_forward_pallas.4} parent=0 // pred_fallthru
    _
  // Predicated region
  $region18: #{encoder_forward_pallas.4} parent=0 // pred_check
    _
  $region19: #{encoder_forward_pallas.4} parent=0 // pred_check_branch
    %98 = sbr.rel (0) target = $region21
  $region20: #{encoder_forward_pallas.4} parent=0 // pred_region
    _
  $region21: #{encoder_forward_pallas.4} parent=0 // pred_fallthru
    _

// kernel: encoder_forward_pallas.5
$region0: #{encoder_forward_pallas.5}
  #allocation0 [shape = 'u32[]', space=smem, size = 0x4, offset = 0x4, fixed_abs, tag = 'smem constant byte address 0x4 - core index']
  #allocation1 [shape = 'u32[72,128]{1,0:T(1,128)}', space=vmem, size = 0x9000, scoped, tag = 'internal scratch']
  #allocation2 [shape = 'f32[8,384]{1,0:T(8,128)}', space=vmem, size = 0x3000, scoped, tag = 'scratch operand']
  %s0 = inlined_call_operand.vmem [shape: f32[8,384], index: 0, kind: input, shape index: {}]
  %s1 = inlined_call_operand.vmem [shape: f32[1,384], index: 1, kind: input, shape index: {}]
  %s2 = inlined_call_operand.vmem [shape: f32[2,8,1], index: 2, kind: input, shape index: {}]
  %s3 = inlined_call_operand.vmem [shape: f32[2,8,1], index: 3, kind: input, shape index: {}]
  %s4 = inlined_call_operand.vmem [shape: bf16[2,8,72], index: 4, kind: input, shape index: {}]
  %s5 = inlined_call_operand.vmem [shape: f32[2,8,1], index: 5, kind: input, shape index: {}]
  %s6 = inlined_call_operand.vmem [shape: f32[2,8,1], index: 6, kind: input, shape index: {}]
  %s7 = inlined_call_operand.vmem [shape: f32[2,8,1], index: 7, kind: input, shape index: {}]
  %s8 = inlined_call_operand.vmem [shape: bf16[2,8,8], index: 8, kind: input, shape index: {}]
  %s9 = inlined_call_operand.vmem [shape: f32[2,8,1], index: 9, kind: input, shape index: {}]
  %s10 = inlined_call_operand.vmem [shape: f32[8,242], index: 10, kind: output, shape index: {}]
  %s11 = sld [smem:[#allocation0]]
  $region50: #{encoder_forward_pallas.5} parent=0
    _
  %s13 = ssub.s32 1, %s11
  %s14 = scalar_select 0, %s13, %s11
  // Predicated region
  $region2: #{encoder_forward_pallas.5} parent=0 // pred_check
    _
  $region3: #{encoder_forward_pallas.5} parent=0 // pred_check_branch
    %16 = sbr.rel (0) target = $region5
  $region4: #{encoder_forward_pallas.5} parent=0 // pred_region
    _
  $region5: #{encoder_forward_pallas.5} parent=0 // pred_fallthru
    _
  // Predicated region
  $region6: #{encoder_forward_pallas.5} parent=0 // pred_check
    _
  $region7: #{encoder_forward_pallas.5} parent=0 // pred_check_branch
    %18 = sbr.rel (0) target = $region9
  $region8: #{encoder_forward_pallas.5} parent=0 // pred_region
    _
  $region9: #{encoder_forward_pallas.5} parent=0 // pred_fallthru
    _
  // Predicated region
  $region10: #{encoder_forward_pallas.5} parent=0 // pred_check
    _
  $region11: #{encoder_forward_pallas.5} parent=0 // pred_check_branch
    %20 = sbr.rel (0) target = $region13
  $region12: #{encoder_forward_pallas.5} parent=0 // pred_region
    _
  $region13: #{encoder_forward_pallas.5} parent=0 // pred_fallthru
    _
  // Predicated region
  $region14: #{encoder_forward_pallas.5} parent=0 // pred_check
    _
  $region15: #{encoder_forward_pallas.5} parent=0 // pred_check_branch
    %22 = sbr.rel (0) target = $region17
  $region16: #{encoder_forward_pallas.5} parent=0 // pred_region
    _
  $region17: #{encoder_forward_pallas.5} parent=0 // pred_fallthru
    _
  // Predicated region
  $region18: #{encoder_forward_pallas.5} parent=0 // pred_check
    _
  $region19: #{encoder_forward_pallas.5} parent=0 // pred_check_branch
    %24 = sbr.rel (0) target = $region21
  $region20: #{encoder_forward_pallas.5} parent=0 // pred_region
    _
  $region21: #{encoder_forward_pallas.5} parent=0 // pred_fallthru
    _
  // Predicated region
  $region22: #{encoder_forward_pallas.5} parent=0 // pred_check
    _
  $region23: #{encoder_forward_pallas.5} parent=0 // pred_check_branch
    %26 = sbr.rel (0) target = $region25
  $region24: #{encoder_forward_pallas.5} parent=0 // pred_region
    _
  $region25: #{encoder_forward_pallas.5} parent=0 // pred_fallthru
    _
  // Predicated region
  $region26: #{encoder_forward_pallas.5} parent=0 // pred_check
    _
  $region27: #{encoder_forward_pallas.5} parent=0 // pred_check_branch
    %28 = sbr.rel (0) target = $region29
  $region28: #{encoder_forward_pallas.5} parent=0 // pred_region
    _
  $region29: #{encoder_forward_pallas.5} parent=0 // pred_fallthru
    _
  // Predicated region
  $region30: #{encoder_forward_pallas.5} parent=0 // pred_check
    _
  $region31: #{encoder_forward_pallas.5} parent=0 // pred_check_branch
    %30 = sbr.rel (0) target = $region33
  $region32: #{encoder_forward_pallas.5} parent=0 // pred_region
    _
  $region33: #{encoder_forward_pallas.5} parent=0 // pred_fallthru
    _
  // Predicated region
  $region34: #{encoder_forward_pallas.5} parent=0 // pred_check
    _
  $region35: #{encoder_forward_pallas.5} parent=0 // pred_check_branch
    %32 = sbr.rel (0) target = $region37
  $region36: #{encoder_forward_pallas.5} parent=0 // pred_region
    _
  $region37: #{encoder_forward_pallas.5} parent=0 // pred_fallthru
    _
  // Predicated region
  $region38: #{encoder_forward_pallas.5} parent=0 // pred_check
    _
  $region39: #{encoder_forward_pallas.5} parent=0 // pred_check_branch
    %34 = sbr.rel (0) target = $region41
  $region40: #{encoder_forward_pallas.5} parent=0 // pred_region
    _
  $region41: #{encoder_forward_pallas.5} parent=0 // pred_fallthru
    _
  %v36 = vld [vmem:[%s0] sm:$0xff]
  %v37 = vld [vmem:[%s0 + $0x8] sm:$0xff]
  %v38 = vld [vmem:[%s0 + $0x10] sm:$0xff]
  %39 = vst [vmem:[#allocation2] sm:$0xff] %v36
  %40 = vst [vmem:[#allocation2 + $0x8] sm:$0xff] %v37
  %41 = vst [vmem:[#allocation2 + $0x10] sm:$0xff] %v38
  %v42 = vld [vmem:[%s1] sm:$0x7]
  %v43 = vld [vmem:[#allocation2] sm:$0xff]
  %v44 = vld [vmem:[#allocation2 + $0x8] sm:$0xff]
  %v45 = vld [vmem:[#allocation2 + $0x10] sm:$0xff]
  %v46 = vmax.f32 %v43, 0.0
  %v47 = vmax.f32 %v44, 0.0
  %v48 = vmax.f32 %v45, 0.0
  %v49 = vld [vmem:[%s2] sm:$0xff]
  %51 = vset.pattern.permute.xlu0 0
  %52 = vperm.xlu0 %51, %v49
  %v53 = vpop.permute.xlu0 %52
  %v55 = vmul.f32 %v46, %v53
  %v56 = vmul.f32 %v47, %v53
  %v57 = vmul.f32 %v48, %v53
  %v58 = vld [vmem:[%s3] sm:$0xff]
  %60 = vset.pattern.permute.xlu0 0
  %61 = vperm.xlu0 %60, %v58
  %v62 = vpop.permute.xlu0 %61
  %v64 = vadd.f32 %v55, %v62
  %v65 = vadd.f32 %v56, %v62
  %v66 = vadd.f32 %v57, %v62
  %v68 = vperm.slane %v42, 0
  %v69 = vperm.slane %v42, 1
  %v70 = vperm.slane %v42, 2
  %v74 = vmul.f32 %v64, %v68
  %v75 = vmul.f32 %v65, %v69
  %v76 = vmul.f32 %v66, %v70
  %v77 = vpack.c.bf16 %v75, %v74
  %v78 = vpack.c.bf16 %v76, %v76
  %v81 = vunpack.c.l.b16 %v77
  %v82 = vunpack.c.h.b16 %v77
  %v83 = vunpack.c.l.b16 %v78
  %v84 = vpack.c.b16 %v81, %v81
  %v85 = vpack.c.b16 %v82, %v82
  %v86 = vpack.c.b16 %v83, %v83
  %87 = vrot.lane.b32.xlu0 %v84, 127
  %v88 = vpop.permute.xlu0 %87
  %89 = vrot.lane.b32.xlu0 %v85, 127
  %v90 = vpop.permute.xlu0 %89
  %91 = vrot.lane.b32.xlu0 %v86, 127
  %v92 = vpop.permute.xlu0 %91
  %vm93 = vcmask 1039360
  %v94 = vsel %vm93, %v88, %v90
  %v95 = vsel %vm93, %v90, %v92
  %96 = vrot.lane.b32.xlu0 %v84, 126
  %v97 = vpop.permute.xlu0 %96
  %98 = vrot.lane.b32.xlu0 %v85, 126
  %v99 = vpop.permute.xlu0 %98
  %100 = vrot.lane.b32.xlu0 %v86, 126
  %v101 = vpop.permute.xlu0 %100
  %vm102 = vcmask 1031168
  %v103 = vsel %vm102, %v97, %v99
  %v104 = vsel %vm102, %v99, %v101
  %105 = vrot.lane.b32.xlu0 %v84, 117
  %v106 = vpop.permute.xlu0 %105
  %107 = vrot.lane.b32.xlu0 %v85, 117
  %v108 = vpop.permute.xlu0 %107
  %109 = vrot.lane.b32.xlu0 %v86, 117
  %v110 = vpop.permute.xlu0 %109
  %vm111 = vcmask 957440
  %v112 = vsel %vm111, %v106, %v108
  %v113 = vsel %vm111, %v108, %v110
  %114 = vrot.lane.b32.xlu0 %v85, 116
  %v115 = vpop.permute.xlu0 %114
  %116 = vrot.lane.b32.xlu0 %v86, 116
  %v117 = vpop.permute.xlu0 %116
  %vm118 = vcmask 949248
  %v119 = vsel %vm118, %v115, %v117
  %120 = vrot.lane.b32.xlu0 %v85, 115
  %v121 = vpop.permute.xlu0 %120
  %122 = vrot.lane.b32.xlu0 %v86, 115
  %v123 = vpop.permute.xlu0 %122
  %vm124 = vcmask 941056
  %v125 = vsel %vm124, %v121, %v123
  %126 = vrot.lane.b32.xlu0 %v85, 106
  %v127 = vpop.permute.xlu0 %126
  %128 = vrot.lane.b32.xlu0 %v86, 106
  %v129 = vpop.permute.xlu0 %128
  %vm130 = vcmask 867328
  %v131 = vsel %vm130, %v127, %v129
  %132 = vrot.lane.b32.xlu0 %v85, 105
  %v133 = vpop.permute.xlu0 %132
  %134 = vrot.lane.b32.xlu0 %v86, 105
  %v135 = vpop.permute.xlu0 %134
  %vm136 = vcmask 859136
  %v137 = vsel %vm136, %v133, %v135
  %138 = vrot.lane.b32.xlu0 %v85, 104
  %v139 = vpop.permute.xlu0 %138
  %140 = vrot.lane.b32.xlu0 %v86, 104
  %v141 = vpop.permute.xlu0 %140
  %vm142 = vcmask 850944
  %v143 = vsel %vm142, %v139, %v141
  %vm144 = vcmask 1043456
  %v147 = vsel %vm144, %v84, %v94
  %v150 = vsel %vm144, %v85, %v95
  %v153 = vsel %vm144, %v86, %v92
  %v156 = vsel %vm144, %v103, %v112
  %v159 = vsel %vm144, %v104, %v113
  %v162 = vsel %vm144, %v101, %v110
  %v165 = vsel %vm144, %v115, %v121
  %v168 = vsel %vm144, %v119, %v125
  %v171 = vsel %vm144, %v117, %v123
  %v174 = vsel %vm144, %v127, %v133
  %v177 = vsel %vm144, %v131, %v137
  %v180 = vsel %vm144, %v129, %v135
  %v181 = vld [vmem:[%s4] sm:$0xf]
  %v182 = vld [vmem:[%s5] sm:$0xff]
  %184 = vset.pattern.permute.xlu0 0
  %185 = vperm.xlu0 %184, %v182
  %v186 = vpop.permute.xlu0 %185
  %200 = vrot.lane.b32.xlu0 %v147, 12
  %v201 = vpop.permute.xlu0 %200
  %202 = vrot.lane.b32.xlu0 %v150, 12
  %v203 = vpop.permute.xlu0 %202
  %204 = vrot.lane.b32.xlu0 %v153, 12
  %v205 = vpop.permute.xlu0 %204
  %206 = vrot.lane.b32.xlu0 %v156, 12
  %v207 = vpop.permute.xlu0 %206
  %208 = vrot.lane.b32.xlu0 %v159, 12
  %v209 = vpop.permute.xlu0 %208
  %210 = vrot.lane.b32.xlu0 %v162, 12
  %v211 = vpop.permute.xlu0 %210
  %212 = vrot.lane.b32.xlu0 %v165, 12
  %v213 = vpop.permute.xlu0 %212
  %214 = vrot.lane.b32.xlu0 %v168, 12
  %v215 = vpop.permute.xlu0 %214
  %216 = vrot.lane.b32.xlu0 %v171, 12
  %v217 = vpop.permute.xlu0 %216
  %218 = vrot.lane.b32.xlu0 %v174, 12
  %v219 = vpop.permute.xlu0 %218
  %220 = vrot.lane.b32.xlu0 %v177, 12
  %v221 = vpop.permute.xlu0 %220
  %222 = vrot.lane.b32.xlu0 %v180, 12
  %v223 = vpop.permute.xlu0 %222
  %224 = vrot.lane.b32.xlu0 %v139, 12
  %v225 = vpop.permute.xlu0 %224
  %226 = vrot.lane.b32.xlu0 %v143, 12
  %v227 = vpop.permute.xlu0 %226
  %228 = vrot.lane.b32.xlu0 %v141, 12
  %v229 = vpop.permute.xlu0 %228
  %vm230 = vcmask 97280
  %v231 = vsel %vm230, %v201, %v203
  %v232 = vsel %vm230, %v203, %v205
  %v233 = vsel %vm230, %v207, %v209
  %v234 = vsel %vm230, %v209, %v211
  %v235 = vsel %vm230, %v213, %v215
  %v236 = vsel %vm230, %v215, %v217
  %v237 = vsel %vm230, %v219, %v221
  %v238 = vsel %vm230, %v221, %v223
  %v239 = vsel %vm230, %v225, %v227
  %v240 = vsel %vm230, %v227, %v229
  %vm249 = vcmask 588800
  %v251 = vsel %vm249, %v181, 0
  %v254 = vsel %vm144, %v239, 0
  %v257 = vsel %vm144, %v240, 0
  %259 = vmatpush.bf16.msra.mxu0 0
  %260 = vmatpush.bf16.msra.mxu0 0
  %261 = vmatpush.bf16.msra.mxu0 0
  %262 = vmatpush.bf16.msra.mxu0 %v254
  %263 = vmatpush.bf16.msra.mxu0 %v237
  %264 = vmatpush.bf16.msra.mxu0 %v235
  %265 = vmatpush.bf16.msra.mxu0 %v233
  %266 = vmatpush.bf16.msra.mxu0 %v231
  %267 = vmatmul.bf16.gmra.mxu0 %v251
  %v268 = vpop.f32.mrf.mxu0
  %v269 = vadd.f32 %v186, %v268
  %v270 = vpop.f32.mrf.mxu0
  %271 = vdwg.mxu0
  %272 = vmatpush.bf16.msra.mxu0 0
  %273 = vmatpush.bf16.msra.mxu0 0
  %274 = vmatpush.bf16.msra.mxu0 0
  %275 = vmatpush.bf16.msra.mxu0 %v257
  %276 = vmatpush.bf16.msra.mxu0 %v238
  %277 = vmatpush.bf16.msra.mxu0 %v236
  %278 = vmatpush.bf16.msra.mxu0 %v234
  %279 = vmatpush.bf16.msra.mxu0 %v232
  %280 = vmatmul.bf16.gmra.mxu0 %v251
  %v281 = vpop.f32.mrf.mxu0
  %v282 = vadd.f32 %v186, %v281
  %v283 = vpop.f32.mrf.mxu0
  %284 = vdwg.mxu0
  %v285 = vmax.f32 %v269, 0.0
  %v286 = vmax.f32 %v282, 0.0
  %v287 = vld [vmem:[%s6] sm:$0xff]
  %289 = vset.pattern.permute.xlu0 0
  %290 = vperm.xlu0 %289, %v287
  %v291 = vpop.permute.xlu0 %290
  %v293 = vmul.f32 %v285, %v291
  %v294 = vmul.f32 %v286, %v291
  %v295 = vld [vmem:[%s7] sm:$0xff]
  %297 = vset.pattern.permute.xlu0 0
  %298 = vperm.xlu0 %297, %v295
  %v299 = vpop.permute.xlu0 %298
  %v301 = vadd.f32 %v293, %v299
  %v302 = vadd.f32 %v294, %v299
  %v303 = vpack.c.bf16 %v301, %v301
  %v304 = vpack.c.bf16 %v302, %v302
  %v305 = vld [vmem:[%s8] sm:$0xf]
  %v306 = vld [vmem:[%s9] sm:$0xff]
  %308 = vset.pattern.permute.xlu0 0
  %309 = vperm.xlu0 %308, %v306
  %v310 = vpop.permute.xlu0 %309
  %vm312 = vcmask 64512
  %v314 = vsel %vm312, %v305, 0
  %v317 = vsel %vm144, %v303, 0
  %v320 = vsel %vm144, %v304, 0
  %322 = vmatpush.bf16.msra.mxu0 0
  %323 = vmatpush.bf16.msra.mxu0 0
  %324 = vmatpush.bf16.msra.mxu0 0
  %325 = vmatpush.bf16.msra.mxu0 0
  %326 = vmatpush.bf16.msra.mxu0 0
  %327 = vmatpush.bf16.msra.mxu0 0
  %328 = vmatpush.bf16.msra.mxu0 0
  %329 = vmatpush.bf16.msra.mxu0 %v317
  %330 = vmatmul.bf16.gmra.mxu0 %v314
  %v331 = vpop.f32.mrf.mxu0
  %v332 = vadd.f32 %v310, %v331
  %v333 = vpop.f32.mrf.mxu0
  %334 = vdwg.mxu0
  %335 = vmatpush.bf16.msra.mxu0 0
  %336 = vmatpush.bf16.msra.mxu0 0
  %337 = vmatpush.bf16.msra.mxu0 0
  %338 = vmatpush.bf16.msra.mxu0 0
  %339 = vmatpush.bf16.msra.mxu0 0
  %340 = vmatpush.bf16.msra.mxu0 0
  %341 = vmatpush.bf16.msra.mxu0 0
  %342 = vmatpush.bf16.msra.mxu0 %v320
  %343 = vmatmul.bf16.gmra.mxu0 %v314
  %v344 = vpop.f32.mrf.mxu0
  %v345 = vadd.f32 %v310, %v344
  %v346 = vpop.f32.mrf.mxu0
  %347 = vdwg.mxu0
  %v348 = vadd.f32 %v44, %v332
  %v349 = vadd.f32 %v45, %v345
  %350 = vst [vmem:[#allocation2 + $0x8] sm:$0xff] %v348
  %vm351 = vcmask 932864
  %352 = vst.msk [vmem:[#allocation2 + $0x10] sm:$0xff] %vm351, %v349
  %v353 = vld [vmem:[#allocation2] sm:$0xff]
  %v354 = vld [vmem:[#allocation2 + $0x8] sm:$0xff]
  %v355 = vld [vmem:[#allocation2 + $0x10] sm:$0xff]
  %v356 = vmax.f32 %v353, 0.0
  %v357 = vmax.f32 %v354, 0.0
  %v358 = vmax.f32 %v355, 0.0
  %s359 = scalar_lea.vmem %s2, 8
  %v360 = vld [vmem:[%s359] sm:$0xff]
  %362 = vset.pattern.permute.xlu0 0
  %363 = vperm.xlu0 %362, %v360
  %v364 = vpop.permute.xlu0 %363
  %v366 = vmul.f32 %v356, %v364
  %v367 = vmul.f32 %v357, %v364
  %v368 = vmul.f32 %v358, %v364
  %s369 = scalar_lea.vmem %s3, 8
  %v370 = vld [vmem:[%s369] sm:$0xff]
  %372 = vset.pattern.permute.xlu0 0
  %373 = vperm.xlu0 %372, %v370
  %v374 = vpop.permute.xlu0 %373
  %v376 = vadd.f32 %v366, %v374
  %v377 = vadd.f32 %v367, %v374
  %v378 = vadd.f32 %v368, %v374
  %v379 = vmul.f32 %v376, %v68
  %v380 = vmul.f32 %v377, %v69
  %v381 = vmul.f32 %v378, %v70
  %v382 = vpack.c.bf16 %v380, %v379
  %v383 = vpack.c.bf16 %v381, %v381
  %v386 = vunpack.c.l.b16 %v382
  %v387 = vunpack.c.h.b16 %v382
  %v388 = vunpack.c.l.b16 %v383
  %v389 = vpack.c.b16 %v386, %v386
  %v390 = vpack.c.b16 %v387, %v387
  %v391 = vpack.c.b16 %v388, %v388
  %392 = vrot.lane.b32.xlu0 %v389, 127
  %v393 = vpop.permute.xlu0 %392
  %394 = vrot.lane.b32.xlu0 %v390, 127
  %v395 = vpop.permute.xlu0 %394
  %396 = vrot.lane.b32.xlu0 %v391, 127
  %v397 = vpop.permute.xlu0 %396
  %v398 = vsel %vm93, %v393, %v395
  %v399 = vsel %vm93, %v395, %v397
  %400 = vrot.lane.b32.xlu0 %v389, 126
  %v401 = vpop.permute.xlu0 %400
  %402 = vrot.lane.b32.xlu0 %v390, 126
  %v403 = vpop.permute.xlu0 %402
  %404 = vrot.lane.b32.xlu0 %v391, 126
  %v405 = vpop.permute.xlu0 %404
  %v406 = vsel %vm102, %v401, %v403
  %v407 = vsel %vm102, %v403, %v405
  %408 = vrot.lane.b32.xlu0 %v389, 117
  %v409 = vpop.permute.xlu0 %408
  %410 = vrot.lane.b32.xlu0 %v390, 117
  %v411 = vpop.permute.xlu0 %410
  %412 = vrot.lane.b32.xlu0 %v391, 117
  %v413 = vpop.permute.xlu0 %412
  %v414 = vsel %vm111, %v409, %v411
  %v415 = vsel %vm111, %v411, %v413
  %416 = vrot.lane.b32.xlu0 %v390, 116
  %v417 = vpop.permute.xlu0 %416
  %418 = vrot.lane.b32.xlu0 %v391, 116
  %v419 = vpop.permute.xlu0 %418
  %v420 = vsel %vm118, %v417, %v419
  %421 = vrot.lane.b32.xlu0 %v390, 115
  %v422 = vpop.permute.xlu0 %421
  %423 = vrot.lane.b32.xlu0 %v391, 115
  %v424 = vpop.permute.xlu0 %423
  %v425 = vsel %vm124, %v422, %v424
  %426 = vrot.lane.b32.xlu0 %v390, 106
  %v427 = vpop.permute.xlu0 %426
  %428 = vrot.lane.b32.xlu0 %v391, 106
  %v429 = vpop.permute.xlu0 %428
  %v430 = vsel %vm130, %v427, %v429
  %431 = vrot.lane.b32.xlu0 %v390, 105
  %v432 = vpop.permute.xlu0 %431
  %433 = vrot.lane.b32.xlu0 %v391, 105
  %v434 = vpop.permute.xlu0 %433
  %v435 = vsel %vm136, %v432, %v434
  %436 = vrot.lane.b32.xlu0 %v390, 104
  %v437 = vpop.permute.xlu0 %436
  %438 = vrot.lane.b32.xlu0 %v391, 104
  %v439 = vpop.permute.xlu0 %438
  %v440 = vsel %vm142, %v437, %v439
  %v443 = vsel %vm144, %v389, %v398
  %v446 = vsel %vm144, %v390, %v399
  %v449 = vsel %vm144, %v391, %v397
  %v452 = vsel %vm144, %v406, %v414
  %v455 = vsel %vm144, %v407, %v415
  %v458 = vsel %vm144, %v405, %v413
  %v461 = vsel %vm144, %v417, %v422
  %v464 = vsel %vm144, %v420, %v425
  %v467 = vsel %vm144, %v419, %v424
  %v470 = vsel %vm144, %v427, %v432
  %v473 = vsel %vm144, %v430, %v435
  %v476 = vsel %vm144, %v429, %v434
  %s477 = scalar_lea.vmem %s4, 4
  %v478 = vld [vmem:[%s477] sm:$0xf]
  %s479 = scalar_lea.vmem %s5, 8
  %v480 = vld [vmem:[%s479] sm:$0xff]
  %482 = vset.pattern.permute.xlu0 0
  %483 = vperm.xlu0 %482, %v480
  %v484 = vpop.permute.xlu0 %483
  %498 = vrot.lane.b32.xlu0 %v443, 12
  %v499 = vpop.permute.xlu0 %498
  %500 = vrot.lane.b32.xlu0 %v446, 12
  %v501 = vpop.permute.xlu0 %500
  %502 = vrot.lane.b32.xlu0 %v449, 12
  %v503 = vpop.permute.xlu0 %502
  %504 = vrot.lane.b32.xlu0 %v452, 12
  %v505 = vpop.permute.xlu0 %504
  %506 = vrot.lane.b32.xlu0 %v455, 12
  %v507 = vpop.permute.xlu0 %506
  %508 = vrot.lane.b32.xlu0 %v458, 12
  %v509 = vpop.permute.xlu0 %508
  %510 = vrot.lane.b32.xlu0 %v461, 12
  %v511 = vpop.permute.xlu0 %510
  %512 = vrot.lane.b32.xlu0 %v464, 12
  %v513 = vpop.permute.xlu0 %512
  %514 = vrot.lane.b32.xlu0 %v467, 12
  %v515 = vpop.permute.xlu0 %514
  %516 = vrot.lane.b32.xlu0 %v470, 12
  %v517 = vpop.permute.xlu0 %516
  %518 = vrot.lane.b32.xlu0 %v473, 12
  %v519 = vpop.permute.xlu0 %518
  %520 = vrot.lane.b32.xlu0 %v476, 12
  %v521 = vpop.permute.xlu0 %520
  %522 = vrot.lane.b32.xlu0 %v437, 12
  %v523 = vpop.permute.xlu0 %522
  %524 = vrot.lane.b32.xlu0 %v440, 12
  %v525 = vpop.permute.xlu0 %524
  %526 = vrot.lane.b32.xlu0 %v439, 12
  %v527 = vpop.permute.xlu0 %526
  %v528 = vsel %vm230, %v499, %v501
  %v529 = vsel %vm230, %v501, %v503
  %v530 = vsel %vm230, %v505, %v507
  %v531 = vsel %vm230, %v507, %v509
  %v532 = vsel %vm230, %v511, %v513
  %v533 = vsel %vm230, %v513, %v515
  %v534 = vsel %vm230, %v517, %v519
  %v535 = vsel %vm230, %v519, %v521
  %v536 = vsel %vm230, %v523, %v525
  %v537 = vsel %vm230, %v525, %v527
  %v547 = vsel %vm249, %v478, 0
  %v550 = vsel %vm144, %v536, 0
  %v553 = vsel %vm144, %v537, 0
  %555 = vmatpush.bf16.msra.mxu0 0
  %556 = vmatpush.bf16.msra.mxu0 0
  %557 = vmatpush.bf16.msra.mxu0 0
  %558 = vmatpush.bf16.msra.mxu0 %v550
  %559 = vmatpush.bf16.msra.mxu0 %v534
  %560 = vmatpush.bf16.msra.mxu0 %v532
  %561 = vmatpush.bf16.msra.mxu0 %v530
  %562 = vmatpush.bf16.msra.mxu0 %v528
  %563 = vmatmul.bf16.gmra.mxu0 %v547
  %v564 = vpop.f32.mrf.mxu0
  %v565 = vadd.f32 %v484, %v564
  %v566 = vpop.f32.mrf.mxu0
  %567 = vdwg.mxu0
  %568 = vmatpush.bf16.msra.mxu0 0
  %569 = vmatpush.bf16.msra.mxu0 0
  %570 = vmatpush.bf16.msra.mxu0 0
  %571 = vmatpush.bf16.msra.mxu0 %v553
  %572 = vmatpush.bf16.msra.mxu0 %v535
  %573 = vmatpush.bf16.msra.mxu0 %v533
  %574 = vmatpush.bf16.msra.mxu0 %v531
  %575 = vmatpush.bf16.msra.mxu0 %v529
  %576 = vmatmul.bf16.gmra.mxu0 %v547
  %v577 = vpop.f32.mrf.mxu0
  %v578 = vadd.f32 %v484, %v577
  %v579 = vpop.f32.mrf.mxu0
  %580 = vdwg.mxu0
  %v581 = vmax.f32 %v565, 0.0
  %v582 = vmax.f32 %v578, 0.0
  %s583 = scalar_lea.vmem %s6, 8
  %v584 = vld [vmem:[%s583] sm:$0xff]
  %586 = vset.pattern.permute.xlu0 0
  %587 = vperm.xlu0 %586, %v584
  %v588 = vpop.permute.xlu0 %587
  %v590 = vmul.f32 %v581, %v588
  %v591 = vmul.f32 %v582, %v588
  %s592 = scalar_lea.vmem %s7, 8
  %v593 = vld [vmem:[%s592] sm:$0xff]
  %595 = vset.pattern.permute.xlu0 0
  %596 = vperm.xlu0 %595, %v593
  %v597 = vpop.permute.xlu0 %596
  %v599 = vadd.f32 %v590, %v597
  %v600 = vadd.f32 %v591, %v597
  %v601 = vpack.c.bf16 %v599, %v599
  %v602 = vpack.c.bf16 %v600, %v600
  %s603 = scalar_lea.vmem %s8, 4
  %v604 = vld [vmem:[%s603] sm:$0xf]
  %s605 = scalar_lea.vmem %s9, 8
  %v606 = vld [vmem:[%s605] sm:$0xff]
  %608 = vset.pattern.permute.xlu0 0
  %609 = vperm.xlu0 %608, %v606
  %v610 = vpop.permute.xlu0 %609
  %v613 = vsel %vm312, %v604, 0
  %v616 = vsel %vm144, %v601, 0
  %v619 = vsel %vm144, %v602, 0
  %621 = vmatpush.bf16.msra.mxu0 0
  %622 = vmatpush.bf16.msra.mxu0 0
  %623 = vmatpush.bf16.msra.mxu0 0
  %624 = vmatpush.bf16.msra.mxu0 0
  %625 = vmatpush.bf16.msra.mxu0 0
  %626 = vmatpush.bf16.msra.mxu0 0
  %627 = vmatpush.bf16.msra.mxu0 0
  %628 = vmatpush.bf16.msra.mxu0 %v616
  %629 = vmatmul.bf16.gmra.mxu0 %v613
  %v630 = vpop.f32.mrf.mxu0
  %v631 = vadd.f32 %v610, %v630
  %v632 = vpop.f32.mrf.mxu0
  %633 = vdwg.mxu0
  %634 = vmatpush.bf16.msra.mxu0 0
  %635 = vmatpush.bf16.msra.mxu0 0
  %636 = vmatpush.bf16.msra.mxu0 0
  %637 = vmatpush.bf16.msra.mxu0 0
  %638 = vmatpush.bf16.msra.mxu0 0
  %639 = vmatpush.bf16.msra.mxu0 0
  %640 = vmatpush.bf16.msra.mxu0 0
  %641 = vmatpush.bf16.msra.mxu0 %v619
  %642 = vmatmul.bf16.gmra.mxu0 %v613
  %v643 = vpop.f32.mrf.mxu0
  %v644 = vadd.f32 %v610, %v643
  %v645 = vpop.f32.mrf.mxu0
  %646 = vdwg.mxu0
  %v647 = vadd.f32 %v354, %v631
  %v648 = vadd.f32 %v355, %v644
  %649 = vst [vmem:[#allocation2 + $0x8] sm:$0xff] %v647
  %650 = vst.msk [vmem:[#allocation2 + $0x10] sm:$0xff] %vm351, %v648
  %v651 = vld [vmem:[#allocation2 + $0x8] sm:$0xff]
  %v652 = vld [vmem:[#allocation2 + $0x10] sm:$0xff]
  %653 = vst [vmem:[%s10] sm:$0xff] %v651
  %654 = vst.msk [vmem:[%s10 + $0x8] sm:$0xff] %vm351, %v652
  // Predicated region
  $region42: #{encoder_forward_pallas.5} parent=0 // pred_check
    _
  $region43: #{encoder_forward_pallas.5} parent=0 // pred_check_branch
    %656 = sbr.rel (0) target = $region45
  $region44: #{encoder_forward_pallas.5} parent=0 // pred_region
    _
  $region45: #{encoder_forward_pallas.5} parent=0 // pred_fallthru
    _
  // Predicated region
  $region46: #{encoder_forward_pallas.5} parent=0 // pred_check
    _
  $region47: #{encoder_forward_pallas.5} parent=0 // pred_check_branch
    %658 = sbr.rel (0) target = $region49
  $region48: #{encoder_forward_pallas.5} parent=0 // pred_region
    _
  $region49: #{encoder_forward_pallas.5} parent=0 // pred_fallthru
    _

// kernel: encoder_forward_pallas.6
$region0: #{encoder_forward_pallas.6}
  #allocation0 [shape = 'u32[]', space=smem, size = 0x4, offset = 0x4, fixed_abs, tag = 'smem constant byte address 0x4 - core index']
  #allocation1 [shape = 'u32[72,128]{1,0:T(1,128)}', space=vmem, size = 0x9000, scoped, tag = 'internal scratch']
  %s0 = inlined_call_operand.vmem [shape: f32[32,56], index: 0, kind: input, shape index: {}]
  %s1 = inlined_call_operand.vmem [shape: bf16[32,128], index: 1, kind: input, shape index: {}]
  %s2 = inlined_call_operand.vmem [shape: f32[32,1], index: 2, kind: input, shape index: {}]
  %s3 = inlined_call_operand.vmem [shape: f32[32,50], index: 3, kind: output, shape index: {}]
  %s4 = sld [smem:[#allocation0]]
  $region22: #{encoder_forward_pallas.6} parent=0
    _
  %s6 = ssub.s32 1, %s4
  %s7 = scalar_select 0, %s6, %s4
  // Predicated region
  $region2: #{encoder_forward_pallas.6} parent=0 // pred_check
    _
  $region3: #{encoder_forward_pallas.6} parent=0 // pred_check_branch
    %9 = sbr.rel (0) target = $region5
  $region4: #{encoder_forward_pallas.6} parent=0 // pred_region
    _
  $region5: #{encoder_forward_pallas.6} parent=0 // pred_fallthru
    _
  // Predicated region
  $region6: #{encoder_forward_pallas.6} parent=0 // pred_check
    _
  $region7: #{encoder_forward_pallas.6} parent=0 // pred_check_branch
    %11 = sbr.rel (0) target = $region9
  $region8: #{encoder_forward_pallas.6} parent=0 // pred_region
    _
  $region9: #{encoder_forward_pallas.6} parent=0 // pred_fallthru
    _
  // Predicated region
  $region10: #{encoder_forward_pallas.6} parent=0 // pred_check
    _
  $region11: #{encoder_forward_pallas.6} parent=0 // pred_check_branch
    %13 = sbr.rel (0) target = $region13
  $region12: #{encoder_forward_pallas.6} parent=0 // pred_region
    _
  $region13: #{encoder_forward_pallas.6} parent=0 // pred_fallthru
    _
  %v14 = vld [vmem:[%s0] sm:$0xff]
  %v15 = vld [vmem:[%s0 + $0x8] sm:$0xff]
  %v16 = vld [vmem:[%s0 + $0x10] sm:$0xff]
  %v17 = vld [vmem:[%s0 + $0x18] sm:$0xff]
  %v18 = vpack.c.bf16 %v14, %v14
  %v19 = vpack.c.bf16 %v15, %v15
  %v20 = vpack.c.bf16 %v16, %v16
  %v21 = vpack.c.bf16 %v17, %v17
  %v26 = vunpack.c.l.b16 %v18
  %v27 = vunpack.c.l.b16 %v19
  %v28 = vunpack.c.l.b16 %v20
  %v29 = vunpack.c.l.b16 %v21
  %v30 = vpack.c.b16 %v27, %v26
  %v31 = vpack.c.b16 %v29, %v28
  %34 = vrot.lane.b32.xlu0 %v30, 127
  %v35 = vpop.permute.xlu0 %34
  %36 = vrot.lane.b32.xlu0 %v31, 127
  %v37 = vpop.permute.xlu0 %36
  %40 = vrot.lane.b32.xlu0 %v30, 123
  %v41 = vpop.permute.xlu0 %40
  %42 = vrot.lane.b32.xlu0 %v31, 123
  %v43 = vpop.permute.xlu0 %42
  %46 = vrot.lane.b32.xlu0 %v30, 122
  %v47 = vpop.permute.xlu0 %46
  %48 = vrot.lane.b32.xlu0 %v31, 122
  %v49 = vpop.permute.xlu0 %48
  %v52 = vld [vmem:[%s1] sm:$0xf]
  %v53 = vld [vmem:[%s1 + $0x4] sm:$0xf]
  %v54 = vld [vmem:[%s1 + $0x8] sm:$0xf]
  %v55 = vld [vmem:[%s1 + $0xc] sm:$0xf]
  %v56 = vld [vmem:[%s2] sm:$0xff]
  %v57 = vld [vmem:[%s2 + $0x8] sm:$0xff]
  %v58 = vld [vmem:[%s2 + $0x10] sm:$0xff]
  %v59 = vld [vmem:[%s2 + $0x18] sm:$0xff]
  %61 = vset.pattern.permute.xlu0 0
  %62 = vperm.xlu0 %61, %v56
  %v63 = vpop.permute.xlu0 %62
  %66 = vset.pattern.permute.xlu0 0
  %67 = vperm.xlu0 %66, %v57
  %v68 = vpop.permute.xlu0 %67
  %71 = vset.pattern.permute.xlu0 0
  %72 = vperm.xlu0 %71, %v58
  %v73 = vpop.permute.xlu0 %72
  %76 = vset.pattern.permute.xlu0 0
  %77 = vperm.xlu0 %76, %v59
  %v78 = vpop.permute.xlu0 %77
  %v84 = vunpack.c.l.b16 %v52
  %v85 = vunpack.c.l.b16 %v53
  %v86 = vunpack.c.l.b16 %v54
  %v87 = vunpack.c.l.b16 %v55
  %v88 = vpack.c.b16 %v85, %v84
  %v89 = vpack.c.b16 %v87, %v86
  %92 = vmatpush.bf16.msra.mxu0 %v49
  %93 = vmatpush.bf16.msra.mxu0 %v47
  %94 = vmatpush.bf16.msra.mxu0 %v43
  %95 = vmatpush.bf16.msra.mxu0 %v41
  %96 = vmatpush.bf16.msra.mxu0 %v37
  %97 = vmatpush.bf16.msra.mxu0 %v35
  %98 = vmatpush.bf16.msra.mxu0 %v31
  %99 = vmatpush.bf16.msra.mxu0 %v30
  %100 = vmatmul.bf16.gmra.mxu0 %v88
  %v101 = vpop.f32.mrf.mxu0
  %v102 = vadd.f32 %v63, %v101
  %v103 = vpop.f32.mrf.mxu0
  %v104 = vadd.f32 %v68, %v103
  %105 = vmatmul.bf16.gmra.mxu0 %v89
  %v106 = vpop.f32.mrf.mxu0
  %v107 = vadd.f32 %v73, %v106
  %v108 = vpop.f32.mrf.mxu0
  %v109 = vadd.f32 %v78, %v108
  %110 = vdwg.mxu0
  %vm111 = vcmask 408576
  %112 = vst.msk [vmem:[%s3] sm:$0xff] %vm111, %v102
  %113 = vst.msk [vmem:[%s3 + $0x8] sm:$0xff] %vm111, %v104
  %114 = vst.msk [vmem:[%s3 + $0x10] sm:$0xff] %vm111, %v107
  %115 = vst.msk [vmem:[%s3 + $0x18] sm:$0xff] %vm111, %v109
  // Predicated region
  $region14: #{encoder_forward_pallas.6} parent=0 // pred_check
    _
  $region15: #{encoder_forward_pallas.6} parent=0 // pred_check_branch
    %117 = sbr.rel (0) target = $region17
  $region16: #{encoder_forward_pallas.6} parent=0 // pred_region
    _
  $region17: #{encoder_forward_pallas.6} parent=0 // pred_fallthru
    _
  // Predicated region
  $region18: #{encoder_forward_pallas.6} parent=0 // pred_check
    _
  $region19: #{encoder_forward_pallas.6} parent=0 // pred_check_branch
    %119 = sbr.rel (0) target = $region21
  $region20: #{encoder_forward_pallas.6} parent=0 // pred_region
    _
  $region21: #{encoder_forward_pallas.6} parent=0 // pred_fallthru
    _

// kernel: encoder_forward_pallas.7
$region0: #{encoder_forward_pallas.7}
  #allocation0 [shape = 'u32[]', space=smem, size = 0x4, offset = 0x4, fixed_abs, tag = 'smem constant byte address 0x4 - core index']
  #allocation1 [shape = 'u32[72,128]{1,0:T(1,128)}', space=vmem, size = 0x9000, scoped, tag = 'internal scratch']
  #allocation2 [shape = 'f32[32,256]{1,0:T(8,128)}', space=vmem, size = 0x8000, scoped, tag = 'scratch operand']
  %s0 = inlined_call_operand.vmem [shape: f32[32,256], index: 0, kind: input, shape index: {}]
  %s1 = inlined_call_operand.vmem [shape: f32[1,256], index: 1, kind: input, shape index: {}]
  %s2 = inlined_call_operand.vmem [shape: f32[2,32,1], index: 2, kind: input, shape index: {}]
  %s3 = inlined_call_operand.vmem [shape: f32[2,32,1], index: 3, kind: input, shape index: {}]
  %s4 = inlined_call_operand.vmem [shape: bf16[2,32,288], index: 4, kind: input, shape index: {}]
  %s5 = inlined_call_operand.vmem [shape: f32[2,32,1], index: 5, kind: input, shape index: {}]
  %s6 = inlined_call_operand.vmem [shape: f32[2,32,1], index: 6, kind: input, shape index: {}]
  %s7 = inlined_call_operand.vmem [shape: f32[2,32,1], index: 7, kind: input, shape index: {}]
  %s8 = inlined_call_operand.vmem [shape: bf16[2,32,32], index: 8, kind: input, shape index: {}]
  %s9 = inlined_call_operand.vmem [shape: f32[2,32,1], index: 9, kind: input, shape index: {}]
  %s10 = inlined_call_operand.vmem [shape: f32[32,72], index: 10, kind: output, shape index: {}]
  %s11 = sld [smem:[#allocation0]]
  $region50: #{encoder_forward_pallas.7} parent=0
    _
  %s13 = ssub.s32 1, %s11
  %s14 = scalar_select 0, %s13, %s11
  // Predicated region
  $region2: #{encoder_forward_pallas.7} parent=0 // pred_check
    _
  $region3: #{encoder_forward_pallas.7} parent=0 // pred_check_branch
    %16 = sbr.rel (0) target = $region5
  $region4: #{encoder_forward_pallas.7} parent=0 // pred_region
    _
  $region5: #{encoder_forward_pallas.7} parent=0 // pred_fallthru
    _
  // Predicated region
  $region6: #{encoder_forward_pallas.7} parent=0 // pred_check
    _
  $region7: #{encoder_forward_pallas.7} parent=0 // pred_check_branch
    %18 = sbr.rel (0) target = $region9
  $region8: #{encoder_forward_pallas.7} parent=0 // pred_region
    _
  $region9: #{encoder_forward_pallas.7} parent=0 // pred_fallthru
    _
  // Predicated region
  $region10: #{encoder_forward_pallas.7} parent=0 // pred_check
    _
  $region11: #{encoder_forward_pallas.7} parent=0 // pred_check_branch
    %20 = sbr.rel (0) target = $region13
  $region12: #{encoder_forward_pallas.7} parent=0 // pred_region
    _
  $region13: #{encoder_forward_pallas.7} parent=0 // pred_fallthru
    _
  // Predicated region
  $region14: #{encoder_forward_pallas.7} parent=0 // pred_check
    _
  $region15: #{encoder_forward_pallas.7} parent=0 // pred_check_branch
    %22 = sbr.rel (0) target = $region17
  $region16: #{encoder_forward_pallas.7} parent=0 // pred_region
    _
  $region17: #{encoder_forward_pallas.7} parent=0 // pred_fallthru
    _
  // Predicated region
  $region18: #{encoder_forward_pallas.7} parent=0 // pred_check
    _
  $region19: #{encoder_forward_pallas.7} parent=0 // pred_check_branch
    %24 = sbr.rel (0) target = $region21
  $region20: #{encoder_forward_pallas.7} parent=0 // pred_region
    _
  $region21: #{encoder_forward_pallas.7} parent=0 // pred_fallthru
    _
  // Predicated region
  $region22: #{encoder_forward_pallas.7} parent=0 // pred_check
    _
  $region23: #{encoder_forward_pallas.7} parent=0 // pred_check_branch
    %26 = sbr.rel (0) target = $region25
  $region24: #{encoder_forward_pallas.7} parent=0 // pred_region
    _
  $region25: #{encoder_forward_pallas.7} parent=0 // pred_fallthru
    _
  // Predicated region
  $region26: #{encoder_forward_pallas.7} parent=0 // pred_check
    _
  $region27: #{encoder_forward_pallas.7} parent=0 // pred_check_branch
    %28 = sbr.rel (0) target = $region29
  $region28: #{encoder_forward_pallas.7} parent=0 // pred_region
    _
  $region29: #{encoder_forward_pallas.7} parent=0 // pred_fallthru
    _
  // Predicated region
  $region30: #{encoder_forward_pallas.7} parent=0 // pred_check
    _
  $region31: #{encoder_forward_pallas.7} parent=0 // pred_check_branch
    %30 = sbr.rel (0) target = $region33
  $region32: #{encoder_forward_pallas.7} parent=0 // pred_region
    _
  $region33: #{encoder_forward_pallas.7} parent=0 // pred_fallthru
    _
  // Predicated region
  $region34: #{encoder_forward_pallas.7} parent=0 // pred_check
    _
  $region35: #{encoder_forward_pallas.7} parent=0 // pred_check_branch
    %32 = sbr.rel (0) target = $region37
  $region36: #{encoder_forward_pallas.7} parent=0 // pred_region
    _
  $region37: #{encoder_forward_pallas.7} parent=0 // pred_fallthru
    _
  // Predicated region
  $region38: #{encoder_forward_pallas.7} parent=0 // pred_check
    _
  $region39: #{encoder_forward_pallas.7} parent=0 // pred_check_branch
    %34 = sbr.rel (0) target = $region41
  $region40: #{encoder_forward_pallas.7} parent=0 // pred_region
    _
  $region41: #{encoder_forward_pallas.7} parent=0 // pred_fallthru
    _
  %v36 = vld [vmem:[%s0] sm:$0xff]
  %v37 = vld [vmem:[%s0 + $0x8] sm:$0xff]
  %v38 = vld [vmem:[%s0 + $0x10] sm:$0xff]
  %v39 = vld [vmem:[%s0 + $0x18] sm:$0xff]
  %v40 = vld [vmem:[%s0 + $0x20] sm:$0xff]
  %v41 = vld [vmem:[%s0 + $0x28] sm:$0xff]
  %v42 = vld [vmem:[%s0 + $0x30] sm:$0xff]
  %v43 = vld [vmem:[%s0 + $0x38] sm:$0xff]
  %44 = vst [vmem:[#allocation2] sm:$0xff] %v36
  %45 = vst [vmem:[#allocation2 + $0x8] sm:$0xff] %v37
  %46 = vst [vmem:[#allocation2 + $0x10] sm:$0xff] %v38
  %47 = vst [vmem:[#allocation2 + $0x18] sm:$0xff] %v39
  %48 = vst [vmem:[#allocation2 + $0x20] sm:$0xff] %v40
  %49 = vst [vmem:[#allocation2 + $0x28] sm:$0xff] %v41
  %50 = vst [vmem:[#allocation2 + $0x30] sm:$0xff] %v42
  %51 = vst [vmem:[#allocation2 + $0x38] sm:$0xff] %v43
  %v52 = vld [vmem:[%s1] sm:$0x3]
  %v53 = vld [vmem:[#allocation2] sm:$0xff]
  %v54 = vld [vmem:[#allocation2 + $0x8] sm:$0xff]
  %v55 = vld [vmem:[#allocation2 + $0x10] sm:$0xff]
  %v56 = vld [vmem:[#allocation2 + $0x18] sm:$0xff]
  %v57 = vld [vmem:[#allocation2 + $0x20] sm:$0xff]
  %v58 = vld [vmem:[#allocation2 + $0x28] sm:$0xff]
  %v59 = vld [vmem:[#allocation2 + $0x30] sm:$0xff]
  %v60 = vld [vmem:[#allocation2 + $0x38] sm:$0xff]
  %v61 = vmax.f32 %v53, 0.0
  %v62 = vmax.f32 %v54, 0.0
  %v63 = vmax.f32 %v55, 0.0
  %v64 = vmax.f32 %v56, 0.0
  %v65 = vmax.f32 %v57, 0.0
  %v66 = vmax.f32 %v58, 0.0
  %v67 = vmax.f32 %v59, 0.0
  %v68 = vmax.f32 %v60, 0.0
  %v69 = vld [vmem:[%s2] sm:$0xff]
  %v70 = vld [vmem:[%s2 + $0x8] sm:$0xff]
  %v71 = vld [vmem:[%s2 + $0x10] sm:$0xff]
  %v72 = vld [vmem:[%s2 + $0x18] sm:$0xff]
  %74 = vset.pattern.permute.xlu0 0
  %75 = vperm.xlu0 %74, %v69
  %v76 = vpop.permute.xlu0 %75
  %79 = vset.pattern.permute.xlu0 0
  %80 = vperm.xlu0 %79, %v70
  %v81 = vpop.permute.xlu0 %80
  %84 = vset.pattern.permute.xlu0 0
  %85 = vperm.xlu0 %84, %v71
  %v86 = vpop.permute.xlu0 %85
  %89 = vset.pattern.permute.xlu0 0
  %90 = vperm.xlu0 %89, %v72
  %v91 = vpop.permute.xlu0 %90
  %v93 = vmul.f32 %v61, %v76
  %v94 = vmul.f32 %v62, %v76
  %v95 = vmul.f32 %v63, %v81
  %v96 = vmul.f32 %v64, %v81
  %v97 = vmul.f32 %v65, %v86
  %v98 = vmul.f32 %v66, %v86
  %v99 = vmul.f32 %v67, %v91
  %v100 = vmul.f32 %v68, %v91
  %v101 = vld [vmem:[%s3] sm:$0xff]
  %v102 = vld [vmem:[%s3 + $0x8] sm:$0xff]
  %v103 = vld [vmem:[%s3 + $0x10] sm:$0xff]
  %v104 = vld [vmem:[%s3 + $0x18] sm:$0xff]
  %106 = vset.pattern.permute.xlu0 0
  %107 = vperm.xlu0 %106, %v101
  %v108 = vpop.permute.xlu0 %107
  %111 = vset.pattern.permute.xlu0 0
  %112 = vperm.xlu0 %111, %v102
  %v113 = vpop.permute.xlu0 %112
  %116 = vset.pattern.permute.xlu0 0
  %117 = vperm.xlu0 %116, %v103
  %v118 = vpop.permute.xlu0 %117
  %121 = vset.pattern.permute.xlu0 0
  %122 = vperm.xlu0 %121, %v104
  %v123 = vpop.permute.xlu0 %122
  %v125 = vadd.f32 %v93, %v108
  %v126 = vadd.f32 %v94, %v108
  %v127 = vadd.f32 %v95, %v113
  %v128 = vadd.f32 %v96, %v113
  %v129 = vadd.f32 %v97, %v118
  %v130 = vadd.f32 %v98, %v118
  %v131 = vadd.f32 %v99, %v123
  %v132 = vadd.f32 %v100, %v123
  %v134 = vperm.slane %v52, 0
  %v135 = vperm.slane %v52, 1
  %v138 = vmul.f32 %v125, %v134
  %v139 = vmul.f32 %v126, %v135
  %v140 = vmul.f32 %v127, %v134
  %v141 = vmul.f32 %v128, %v135
  %v142 = vmul.f32 %v129, %v134
  %v143 = vmul.f32 %v130, %v135
  %v144 = vmul.f32 %v131, %v134
  %v145 = vmul.f32 %v132, %v135
  %v146 = vpack.c.bf16 %v139, %v138
  %v147 = vpack.c.bf16 %v141, %v140
  %v148 = vpack.c.bf16 %v143, %v142
  %v149 = vpack.c.bf16 %v145, %v144
  %v154 = vunpack.c.l.b16 %v146
  %v155 = vunpack.c.h.b16 %v146
  %v156 = vunpack.c.l.b16 %v147
  %v157 = vunpack.c.h.b16 %v147
  %v158 = vunpack.c.l.b16 %v148
  %v159 = vunpack.c.h.b16 %v148
  %v160 = vunpack.c.l.b16 %v149
  %v161 = vunpack.c.h.b16 %v149
  %v162 = vpack.c.b16 %v156, %v154
  %v163 = vpack.c.b16 %v157, %v155
  %v164 = vpack.c.b16 %v160, %v158
  %v165 = vpack.c.b16 %v161, %v159
  %166 = vrot.lane.b32.xlu0 %v162, 127
  %v167 = vpop.permute.xlu0 %166
  %168 = vrot.lane.b32.xlu0 %v163, 127
  %v169 = vpop.permute.xlu0 %168
  %170 = vrot.lane.b32.xlu0 %v164, 127
  %v171 = vpop.permute.xlu0 %170
  %172 = vrot.lane.b32.xlu0 %v165, 127
  %v173 = vpop.permute.xlu0 %172
  %vm174 = vcmask 1039360
  %v175 = vsel %vm174, %v167, %v169
  %v176 = vsel %vm174, %v171, %v173
  %177 = vrot.lane.b32.xlu0 %v162, 126
  %v178 = vpop.permute.xlu0 %177
  %179 = vrot.lane.b32.xlu0 %v163, 126
  %v180 = vpop.permute.xlu0 %179
  %181 = vrot.lane.b32.xlu0 %v164, 126
  %v182 = vpop.permute.xlu0 %181
  %183 = vrot.lane.b32.xlu0 %v165, 126
  %v184 = vpop.permute.xlu0 %183
  %vm185 = vcmask 1031168
  %v186 = vsel %vm185, %v178, %v180
  %v187 = vsel %vm185, %v182, %v184
  %188 = vrot.lane.b32.xlu0 %v162, 122
  %v189 = vpop.permute.xlu0 %188
  %190 = vrot.lane.b32.xlu0 %v163, 122
  %v191 = vpop.permute.xlu0 %190
  %192 = vrot.lane.b32.xlu0 %v164, 122
  %v193 = vpop.permute.xlu0 %192
  %194 = vrot.lane.b32.xlu0 %v165, 122
  %v195 = vpop.permute.xlu0 %194
  %vm196 = vcmask 998400
  %v197 = vsel %vm196, %v189, %v191
  %v198 = vsel %vm196, %v193, %v195
  %199 = vrot.lane.b32.xlu0 %v163, 121
  %v200 = vpop.permute.xlu0 %199
  %201 = vrot.lane.b32.xlu0 %v165, 121
  %v202 = vpop.permute.xlu0 %201
  %203 = vrot.lane.b32.xlu0 %v163, 120
  %v204 = vpop.permute.xlu0 %203
  %205 = vrot.lane.b32.xlu0 %v165, 120
  %v206 = vpop.permute.xlu0 %205
  %207 = vrot.lane.b32.xlu0 %v163, 116
  %v208 = vpop.permute.xlu0 %207
  %209 = vrot.lane.b32.xlu0 %v165, 116
  %v210 = vpop.permute.xlu0 %209
  %211 = vrot.lane.b32.xlu0 %v163, 115
  %v212 = vpop.permute.xlu0 %211
  %213 = vrot.lane.b32.xlu0 %v165, 115
  %v214 = vpop.permute.xlu0 %213
  %215 = vrot.lane.b32.xlu0 %v163, 114
  %v216 = vpop.permute.xlu0 %215
  %217 = vrot.lane.b32.xlu0 %v165, 114
  %v218 = vpop.permute.xlu0 %217
  %v219 = vld [vmem:[%s4] sm:$0xff]
  %v220 = vld [vmem:[%s4 + $0x8] sm:$0xf]
  %v221 = vld [vmem:[%s4 + $0xc] sm:$0xff]
  %v222 = vld [vmem:[%s4 + $0x14] sm:$0xf]
  %v223 = vld [vmem:[%s4 + $0x18] sm:$0xff]
  %v224 = vld [vmem:[%s4 + $0x20] sm:$0xf]
  %v225 = vld [vmem:[%s4 + $0x24] sm:$0xff]
  %v226 = vld [vmem:[%s4 + $0x2c] sm:$0xf]
  %v227 = vld [vmem:[%s5] sm:$0xff]
  %v228 = vld [vmem:[%s5 + $0x8] sm:$0xff]
  %v229 = vld [vmem:[%s5 + $0x10] sm:$0xff]
  %v230 = vld [vmem:[%s5 + $0x18] sm:$0xff]
  %232 = vset.pattern.permute.xlu0 0
  %233 = vperm.xlu0 %232, %v227
  %v234 = vpop.permute.xlu0 %233
  %237 = vset.pattern.permute.xlu0 0
  %238 = vperm.xlu0 %237, %v228
  %v239 = vpop.permute.xlu0 %238
  %242 = vset.pattern.permute.xlu0 0
  %243 = vperm.xlu0 %242, %v229
  %v244 = vpop.permute.xlu0 %243
  %247 = vset.pattern.permute.xlu0 0
  %248 = vperm.xlu0 %247, %v230
  %v249 = vpop.permute.xlu0 %248
  %v259 = vunpack.c.l.b16 %v219
  %v260 = vunpack.c.h.b16 %v219
  %v261 = vunpack.c.l.b16 %v220
  %v262 = vunpack.c.l.b16 %v221
  %v263 = vunpack.c.h.b16 %v221
  %v264 = vunpack.c.l.b16 %v222
  %v265 = vunpack.c.l.b16 %v223
  %v266 = vunpack.c.h.b16 %v223
  %v267 = vunpack.c.l.b16 %v224
  %v268 = vunpack.c.l.b16 %v225
  %v269 = vunpack.c.h.b16 %v225
  %v270 = vunpack.c.l.b16 %v226
  %v271 = vpack.c.b16 %v262, %v259
  %v272 = vpack.c.b16 %v263, %v260
  %v273 = vpack.c.b16 %v264, %v261
  %v274 = vpack.c.b16 %v268, %v265
  %v275 = vpack.c.b16 %v269, %v266
  %v276 = vpack.c.b16 %v270, %v267
  %281 = vrot.lane.b32.xlu0 %v162, 7
  %v282 = vpop.permute.xlu0 %281
  %283 = vrot.lane.b32.xlu0 %v163, 7
  %v284 = vpop.permute.xlu0 %283
  %285 = vrot.lane.b32.xlu0 %v164, 7
  %v286 = vpop.permute.xlu0 %285
  %287 = vrot.lane.b32.xlu0 %v165, 7
  %v288 = vpop.permute.xlu0 %287
  %289 = vrot.lane.b32.xlu0 %v175, 7
  %v290 = vpop.permute.xlu0 %289
  %291 = vrot.lane.b32.xlu0 %v169, 7
  %v292 = vpop.permute.xlu0 %291
  %293 = vrot.lane.b32.xlu0 %v176, 7
  %v294 = vpop.permute.xlu0 %293
  %295 = vrot.lane.b32.xlu0 %v173, 7
  %v296 = vpop.permute.xlu0 %295
  %297 = vrot.lane.b32.xlu0 %v186, 7
  %v298 = vpop.permute.xlu0 %297
  %299 = vrot.lane.b32.xlu0 %v180, 7
  %v300 = vpop.permute.xlu0 %299
  %301 = vrot.lane.b32.xlu0 %v187, 7
  %v302 = vpop.permute.xlu0 %301
  %303 = vrot.lane.b32.xlu0 %v184, 7
  %v304 = vpop.permute.xlu0 %303
  %305 = vrot.lane.b32.xlu0 %v197, 7
  %v306 = vpop.permute.xlu0 %305
  %307 = vrot.lane.b32.xlu0 %v191, 7
  %v308 = vpop.permute.xlu0 %307
  %309 = vrot.lane.b32.xlu0 %v198, 7
  %v310 = vpop.permute.xlu0 %309
  %311 = vrot.lane.b32.xlu0 %v195, 7
  %v312 = vpop.permute.xlu0 %311
  %313 = vrot.lane.b32.xlu0 %v200, 7
  %v314 = vpop.permute.xlu0 %313
  %315 = vrot.lane.b32.xlu0 %v202, 7
  %v316 = vpop.permute.xlu0 %315
  %317 = vrot.lane.b32.xlu0 %v204, 7
  %v318 = vpop.permute.xlu0 %317
  %319 = vrot.lane.b32.xlu0 %v206, 7
  %v320 = vpop.permute.xlu0 %319
  %321 = vrot.lane.b32.xlu0 %v208, 7
  %v322 = vpop.permute.xlu0 %321
  %323 = vrot.lane.b32.xlu0 %v210, 7
  %v324 = vpop.permute.xlu0 %323
  %325 = vrot.lane.b32.xlu0 %v212, 7
  %v326 = vpop.permute.xlu0 %325
  %327 = vrot.lane.b32.xlu0 %v214, 7
  %v328 = vpop.permute.xlu0 %327
  %329 = vrot.lane.b32.xlu0 %v216, 7
  %v330 = vpop.permute.xlu0 %329
  %331 = vrot.lane.b32.xlu0 %v218, 7
  %v332 = vpop.permute.xlu0 %331
  %vm333 = vcmask 56320
  %v334 = vsel %vm333, %v282, %v284
  %v335 = vsel %vm333, %v286, %v288
  %v336 = vsel %vm333, %v290, %v292
  %v337 = vsel %vm333, %v294, %v296
  %v338 = vsel %vm333, %v298, %v300
  %v339 = vsel %vm333, %v302, %v304
  %v340 = vsel %vm333, %v306, %v308
  %v341 = vsel %vm333, %v310, %v312
  %vm360 = vcmask 261120
  %v362 = vsel %vm360, %v273, 0
  %v365 = vsel %vm360, %v276, 0
  %367 = vmatpush.bf16.msra.mxu0 %v341
  %368 = vmatpush.bf16.msra.mxu0 %v340
  %369 = vmatpush.bf16.msra.mxu0 %v339
  %370 = vmatpush.bf16.msra.mxu0 %v338
  %371 = vmatpush.bf16.msra.mxu0 %v337
  %372 = vmatpush.bf16.msra.mxu0 %v336
  %373 = vmatpush.bf16.msra.mxu0 %v335
  %374 = vmatpush.bf16.msra.mxu0 %v334
  %375 = vmatmul.bf16.gmra.mxu0 %v271
  %v376 = vpop.f32.mrf.mxu0
  %v377 = vadd.f32 %v234, %v376
  %v378 = vpop.f32.mrf.mxu0
  %v379 = vadd.f32 %v239, %v378
  %380 = vmatmul.bf16.gmra.mxu0 %v274
  %v381 = vpop.f32.mrf.mxu0
  %v382 = vadd.f32 %v244, %v381
  %v383 = vpop.f32.mrf.mxu0
  %v384 = vadd.f32 %v249, %v383
  %385 = vdwg.mxu0
  %386 = vmatpush.bf16.msra.mxu0 %v328
  %387 = vmatpush.bf16.msra.mxu0 %v326
  %388 = vmatpush.bf16.msra.mxu0 %v324
  %389 = vmatpush.bf16.msra.mxu0 %v322
  %390 = vmatpush.bf16.msra.mxu0 %v320
  %391 = vmatpush.bf16.msra.mxu0 %v318
  %392 = vmatpush.bf16.msra.mxu0 %v316
  %393 = vmatpush.bf16.msra.mxu0 %v314
  %394 = vmatmul.bf16.gmra.mxu0 %v272
  %v395 = vpop.f32.mrf.mxu0
  %v396 = vadd.f32 %v377, %v395
  %v397 = vpop.f32.mrf.mxu0
  %v398 = vadd.f32 %v379, %v397
  %399 = vmatmul.bf16.gmra.mxu0 %v275
  %v400 = vpop.f32.mrf.mxu0
  %v401 = vadd.f32 %v382, %v400
  %v402 = vpop.f32.mrf.mxu0
  %v403 = vadd.f32 %v384, %v402
  %404 = vdwg.mxu0
  %405 = vmatpush.bf16.msra.mxu0 0
  %406 = vmatpush.bf16.msra.mxu0 0
  %407 = vmatpush.bf16.msra.mxu0 0
  %408 = vmatpush.bf16.msra.mxu0 0
  %409 = vmatpush.bf16.msra.mxu0 0
  %410 = vmatpush.bf16.msra.mxu0 0
  %411 = vmatpush.bf16.msra.mxu0 %v332
  %412 = vmatpush.bf16.msra.mxu0 %v330
  %413 = vmatmul.bf16.gmra.mxu0 %v362
  %v414 = vpop.f32.mrf.mxu0
  %v415 = vadd.f32 %v396, %v414
  %v416 = vpop.f32.mrf.mxu0
  %v417 = vadd.f32 %v398, %v416
  %418 = vmatmul.bf16.gmra.mxu0 %v365
  %v419 = vpop.f32.mrf.mxu0
  %v420 = vadd.f32 %v401, %v419
  %v421 = vpop.f32.mrf.mxu0
  %v422 = vadd.f32 %v403, %v421
  %423 = vdwg.mxu0
  %v424 = vmax.f32 %v415, 0.0
  %v425 = vmax.f32 %v417, 0.0
  %v426 = vmax.f32 %v420, 0.0
  %v427 = vmax.f32 %v422, 0.0
  %v428 = vld [vmem:[%s6] sm:$0xff]
  %v429 = vld [vmem:[%s6 + $0x8] sm:$0xff]
  %v430 = vld [vmem:[%s6 + $0x10] sm:$0xff]
  %v431 = vld [vmem:[%s6 + $0x18] sm:$0xff]
  %433 = vset.pattern.permute.xlu0 0
  %434 = vperm.xlu0 %433, %v428
  %v435 = vpop.permute.xlu0 %434
  %438 = vset.pattern.permute.xlu0 0
  %439 = vperm.xlu0 %438, %v429
  %v440 = vpop.permute.xlu0 %439
  %443 = vset.pattern.permute.xlu0 0
  %444 = vperm.xlu0 %443, %v430
  %v445 = vpop.permute.xlu0 %444
  %448 = vset.pattern.permute.xlu0 0
  %449 = vperm.xlu0 %448, %v431
  %v450 = vpop.permute.xlu0 %449
  %v452 = vmul.f32 %v424, %v435
  %v453 = vmul.f32 %v425, %v440
  %v454 = vmul.f32 %v426, %v445
  %v455 = vmul.f32 %v427, %v450
  %v456 = vld [vmem:[%s7] sm:$0xff]
  %v457 = vld [vmem:[%s7 + $0x8] sm:$0xff]
  %v458 = vld [vmem:[%s7 + $0x10] sm:$0xff]
  %v459 = vld [vmem:[%s7 + $0x18] sm:$0xff]
  %461 = vset.pattern.permute.xlu0 0
  %462 = vperm.xlu0 %461, %v456
  %v463 = vpop.permute.xlu0 %462
  %466 = vset.pattern.permute.xlu0 0
  %467 = vperm.xlu0 %466, %v457
  %v468 = vpop.permute.xlu0 %467
  %471 = vset.pattern.permute.xlu0 0
  %472 = vperm.xlu0 %471, %v458
  %v473 = vpop.permute.xlu0 %472
  %476 = vset.pattern.permute.xlu0 0
  %477 = vperm.xlu0 %476, %v459
  %v478 = vpop.permute.xlu0 %477
  %v480 = vadd.f32 %v452, %v463
  %v481 = vadd.f32 %v453, %v468
  %v482 = vadd.f32 %v454, %v473
  %v483 = vadd.f32 %v455, %v478
  %v484 = vpack.c.bf16 %v481, %v480
  %v485 = vpack.c.bf16 %v483, %v482
  %v486 = vld [vmem:[%s8] sm:$0xf]
  %v487 = vld [vmem:[%s8 + $0x4] sm:$0xf]
  %v488 = vld [vmem:[%s8 + $0x8] sm:$0xf]
  %v489 = vld [vmem:[%s8 + $0xc] sm:$0xf]
  %v490 = vld [vmem:[%s9] sm:$0xff]
  %v491 = vld [vmem:[%s9 + $0x8] sm:$0xff]
  %v492 = vld [vmem:[%s9 + $0x10] sm:$0xff]
  %v493 = vld [vmem:[%s9 + $0x18] sm:$0xff]
  %495 = vset.pattern.permute.xlu0 0
  %496 = vperm.xlu0 %495, %v490
  %v497 = vpop.permute.xlu0 %496
  %500 = vset.pattern.permute.xlu0 0
  %501 = vperm.xlu0 %500, %v491
  %v502 = vpop.permute.xlu0 %501
  %505 = vset.pattern.permute.xlu0 0
  %506 = vperm.xlu0 %505, %v492
  %v507 = vpop.permute.xlu0 %506
  %510 = vset.pattern.permute.xlu0 0
  %511 = vperm.xlu0 %510, %v493
  %v512 = vpop.permute.xlu0 %511
  %v518 = vunpack.c.l.b16 %v486
  %v519 = vunpack.c.l.b16 %v487
  %v520 = vunpack.c.l.b16 %v488
  %v521 = vunpack.c.l.b16 %v489
  %v522 = vpack.c.b16 %v519, %v518
  %v523 = vpack.c.b16 %v521, %v520
  %v525 = vsel %vm360, %v522, 0
  %v528 = vsel %vm360, %v523, 0
  %530 = vmatpush.bf16.msra.mxu0 0
  %531 = vmatpush.bf16.msra.mxu0 0
  %532 = vmatpush.bf16.msra.mxu0 0
  %533 = vmatpush.bf16.msra.mxu0 0
  %534 = vmatpush.bf16.msra.mxu0 0
  %535 = vmatpush.bf16.msra.mxu0 0
  %536 = vmatpush.bf16.msra.mxu0 %v485
  %537 = vmatpush.bf16.msra.mxu0 %v484
  %538 = vmatmul.bf16.gmra.mxu0 %v525
  %v539 = vpop.f32.mrf.mxu0
  %v540 = vadd.f32 %v497, %v539
  %v541 = vpop.f32.mrf.mxu0
  %v542 = vadd.f32 %v502, %v541
  %543 = vmatmul.bf16.gmra.mxu0 %v528
  %v544 = vpop.f32.mrf.mxu0
  %v545 = vadd.f32 %v507, %v544
  %v546 = vpop.f32.mrf.mxu0
  %v547 = vadd.f32 %v512, %v546
  %548 = vdwg.mxu0
  %v549 = vadd.f32 %v54, %v540
  %v550 = vadd.f32 %v56, %v542
  %v551 = vadd.f32 %v58, %v545
  %v552 = vadd.f32 %v60, %v547
  %vm553 = vcmask 588800
  %554 = vst.msk [vmem:[#allocation2 + $0x8] sm:$0xff] %vm553, %v549
  %555 = vst.msk [vmem:[#allocation2 + $0x18] sm:$0xff] %vm553, %v550
  %556 = vst.msk [vmem:[#allocation2 + $0x28] sm:$0xff] %vm553, %v551
  %557 = vst.msk [vmem:[#allocation2 + $0x38] sm:$0xff] %vm553, %v552
  %v558 = vld [vmem:[#allocation2] sm:$0xff]
  %v559 = vld [vmem:[#allocation2 + $0x8] sm:$0xff]
  %v560 = vld [vmem:[#allocation2 + $0x10] sm:$0xff]
  %v561 = vld [vmem:[#allocation2 + $0x18] sm:$0xff]
  %v562 = vld [vmem:[#allocation2 + $0x20] sm:$0xff]
  %v563 = vld [vmem:[#allocation2 + $0x28] sm:$0xff]
  %v564 = vld [vmem:[#allocation2 + $0x30] sm:$0xff]
  %v565 = vld [vmem:[#allocation2 + $0x38] sm:$0xff]
  %v566 = vmax.f32 %v558, 0.0
  %v567 = vmax.f32 %v559, 0.0
  %v568 = vmax.f32 %v560, 0.0
  %v569 = vmax.f32 %v561, 0.0
  %v570 = vmax.f32 %v562, 0.0
  %v571 = vmax.f32 %v563, 0.0
  %v572 = vmax.f32 %v564, 0.0
  %v573 = vmax.f32 %v565, 0.0
  %s574 = scalar_lea.vmem %s2, 32
  %v575 = vld [vmem:[%s574] sm:$0xff]
  %v576 = vld [vmem:[%s574 + $0x8] sm:$0xff]
  %v577 = vld [vmem:[%s574 + $0x10] sm:$0xff]
  %v578 = vld [vmem:[%s574 + $0x18] sm:$0xff]
  %580 = vset.pattern.permute.xlu0 0
  %581 = vperm.xlu0 %580, %v575
  %v582 = vpop.permute.xlu0 %581
  %585 = vset.pattern.permute.xlu0 0
  %586 = vperm.xlu0 %585, %v576
  %v587 = vpop.permute.xlu0 %586
  %590 = vset.pattern.permute.xlu0 0
  %591 = vperm.xlu0 %590, %v577
  %v592 = vpop.permute.xlu0 %591
  %595 = vset.pattern.permute.xlu0 0
  %596 = vperm.xlu0 %595, %v578
  %v597 = vpop.permute.xlu0 %596
  %v599 = vmul.f32 %v566, %v582
  %v600 = vmul.f32 %v567, %v582
  %v601 = vmul.f32 %v568, %v587
  %v602 = vmul.f32 %v569, %v587
  %v603 = vmul.f32 %v570, %v592
  %v604 = vmul.f32 %v571, %v592
  %v605 = vmul.f32 %v572, %v597
  %v606 = vmul.f32 %v573, %v597
  %s607 = scalar_lea.vmem %s3, 32
  %v608 = vld [vmem:[%s607] sm:$0xff]
  %v609 = vld [vmem:[%s607 + $0x8] sm:$0xff]
  %v610 = vld [vmem:[%s607 + $0x10] sm:$0xff]
  %v611 = vld [vmem:[%s607 + $0x18] sm:$0xff]
  %613 = vset.pattern.permute.xlu0 0
  %614 = vperm.xlu0 %613, %v608
  %v615 = vpop.permute.xlu0 %614
  %618 = vset.pattern.permute.xlu0 0
  %619 = vperm.xlu0 %618, %v609
  %v620 = vpop.permute.xlu0 %619
  %623 = vset.pattern.permute.xlu0 0
  %624 = vperm.xlu0 %623, %v610
  %v625 = vpop.permute.xlu0 %624
  %628 = vset.pattern.permute.xlu0 0
  %629 = vperm.xlu0 %628, %v611
  %v630 = vpop.permute.xlu0 %629
  %v632 = vadd.f32 %v599, %v615
  %v633 = vadd.f32 %v600, %v615
  %v634 = vadd.f32 %v601, %v620
  %v635 = vadd.f32 %v602, %v620
  %v636 = vadd.f32 %v603, %v625
  %v637 = vadd.f32 %v604, %v625
  %v638 = vadd.f32 %v605, %v630
  %v639 = vadd.f32 %v606, %v630
  %v640 = vmul.f32 %v632, %v134
  %v641 = vmul.f32 %v633, %v135
  %v642 = vmul.f32 %v634, %v134
  %v643 = vmul.f32 %v635, %v135
  %v644 = vmul.f32 %v636, %v134
  %v645 = vmul.f32 %v637, %v135
  %v646 = vmul.f32 %v638, %v134
  %v647 = vmul.f32 %v639, %v135
  %v648 = vpack.c.bf16 %v641, %v640
  %v649 = vpack.c.bf16 %v643, %v642
  %v650 = vpack.c.bf16 %v645, %v644
  %v651 = vpack.c.bf16 %v647, %v646
  %v656 = vunpack.c.l.b16 %v648
  %v657 = vunpack.c.h.b16 %v648
  %v658 = vunpack.c.l.b16 %v649
  %v659 = vunpack.c.h.b16 %v649
  %v660 = vunpack.c.l.b16 %v650
  %v661 = vunpack.c.h.b16 %v650
  %v662 = vunpack.c.l.b16 %v651
  %v663 = vunpack.c.h.b16 %v651
  %v664 = vpack.c.b16 %v658, %v656
  %v665 = vpack.c.b16 %v659, %v657
  %v666 = vpack.c.b16 %v662, %v660
  %v667 = vpack.c.b16 %v663, %v661
  %668 = vrot.lane.b32.xlu0 %v664, 127
  %v669 = vpop.permute.xlu0 %668
  %670 = vrot.lane.b32.xlu0 %v665, 127
  %v671 = vpop.permute.xlu0 %670
  %672 = vrot.lane.b32.xlu0 %v666, 127
  %v673 = vpop.permute.xlu0 %672
  %674 = vrot.lane.b32.xlu0 %v667, 127
  %v675 = vpop.permute.xlu0 %674
  %v676 = vsel %vm174, %v669, %v671
  %v677 = vsel %vm174, %v673, %v675
  %678 = vrot.lane.b32.xlu0 %v664, 126
  %v679 = vpop.permute.xlu0 %678
  %680 = vrot.lane.b32.xlu0 %v665, 126
  %v681 = vpop.permute.xlu0 %680
  %682 = vrot.lane.b32.xlu0 %v666, 126
  %v683 = vpop.permute.xlu0 %682
  %684 = vrot.lane.b32.xlu0 %v667, 126
  %v685 = vpop.permute.xlu0 %684
  %v686 = vsel %vm185, %v679, %v681
  %v687 = vsel %vm185, %v683, %v685
  %688 = vrot.lane.b32.xlu0 %v664, 122
  %v689 = vpop.permute.xlu0 %688
  %690 = vrot.lane.b32.xlu0 %v665, 122
  %v691 = vpop.permute.xlu0 %690
  %692 = vrot.lane.b32.xlu0 %v666, 122
  %v693 = vpop.permute.xlu0 %692
  %694 = vrot.lane.b32.xlu0 %v667, 122
  %v695 = vpop.permute.xlu0 %694
  %v696 = vsel %vm196, %v689, %v691
  %v697 = vsel %vm196, %v693, %v695
  %698 = vrot.lane.b32.xlu0 %v665, 121
  %v699 = vpop.permute.xlu0 %698
  %700 = vrot.lane.b32.xlu0 %v667, 121
  %v701 = vpop.permute.xlu0 %700
  %702 = vrot.lane.b32.xlu0 %v665, 120
  %v703 = vpop.permute.xlu0 %702
  %704 = vrot.lane.b32.xlu0 %v667, 120
  %v705 = vpop.permute.xlu0 %704
  %706 = vrot.lane.b32.xlu0 %v665, 116
  %v707 = vpop.permute.xlu0 %706
  %708 = vrot.lane.b32.xlu0 %v667, 116
  %v709 = vpop.permute.xlu0 %708
  %710 = vrot.lane.b32.xlu0 %v665, 115
  %v711 = vpop.permute.xlu0 %710
  %712 = vrot.lane.b32.xlu0 %v667, 115
  %v713 = vpop.permute.xlu0 %712
  %714 = vrot.lane.b32.xlu0 %v665, 114
  %v715 = vpop.permute.xlu0 %714
  %716 = vrot.lane.b32.xlu0 %v667, 114
  %v717 = vpop.permute.xlu0 %716
  %s718 = scalar_lea.vmem %s4, 48
  %v719 = vld [vmem:[%s718] sm:$0xff]
  %v720 = vld [vmem:[%s718 + $0x8] sm:$0xf]
  %v721 = vld [vmem:[%s718 + $0xc] sm:$0xff]
  %v722 = vld [vmem:[%s718 + $0x14] sm:$0xf]
  %v723 = vld [vmem:[%s718 + $0x18] sm:$0xff]
  %v724 = vld [vmem:[%s718 + $0x20] sm:$0xf]
  %v725 = vld [vmem:[%s718 + $0x24] sm:$0xff]
  %v726 = vld [vmem:[%s718 + $0x2c] sm:$0xf]
  %s727 = scalar_lea.vmem %s5, 32
  %v728 = vld [vmem:[%s727] sm:$0xff]
  %v729 = vld [vmem:[%s727 + $0x8] sm:$0xff]
  %v730 = vld [vmem:[%s727 + $0x10] sm:$0xff]
  %v731 = vld [vmem:[%s727 + $0x18] sm:$0xff]
  %733 = vset.pattern.permute.xlu0 0
  %734 = vperm.xlu0 %733, %v728
  %v735 = vpop.permute.xlu0 %734
  %738 = vset.pattern.permute.xlu0 0
  %739 = vperm.xlu0 %738, %v729
  %v740 = vpop.permute.xlu0 %739
  %743 = vset.pattern.permute.xlu0 0
  %744 = vperm.xlu0 %743, %v730
  %v745 = vpop.permute.xlu0 %744
  %748 = vset.pattern.permute.xlu0 0
  %749 = vperm.xlu0 %748, %v731
  %v750 = vpop.permute.xlu0 %749
  %v760 = vunpack.c.l.b16 %v719
  %v761 = vunpack.c.h.b16 %v719
  %v762 = vunpack.c.l.b16 %v720
  %v763 = vunpack.c.l.b16 %v721
  %v764 = vunpack.c.h.b16 %v721
  %v765 = vunpack.c.l.b16 %v722
  %v766 = vunpack.c.l.b16 %v723
  %v767 = vunpack.c.h.b16 %v723
  %v768 = vunpack.c.l.b16 %v724
  %v769 = vunpack.c.l.b16 %v725
  %v770 = vunpack.c.h.b16 %v725
  %v771 = vunpack.c.l.b16 %v726
  %v772 = vpack.c.b16 %v763, %v760
  %v773 = vpack.c.b16 %v764, %v761
  %v774 = vpack.c.b16 %v765, %v762
  %v775 = vpack.c.b16 %v769, %v766
  %v776 = vpack.c.b16 %v770, %v767
  %v777 = vpack.c.b16 %v771, %v768
  %782 = vrot.lane.b32.xlu0 %v664, 7
  %v783 = vpop.permute.xlu0 %782
  %784 = vrot.lane.b32.xlu0 %v665, 7
  %v785 = vpop.permute.xlu0 %784
  %786 = vrot.lane.b32.xlu0 %v666, 7
  %v787 = vpop.permute.xlu0 %786
  %788 = vrot.lane.b32.xlu0 %v667, 7
  %v789 = vpop.permute.xlu0 %788
  %790 = vrot.lane.b32.xlu0 %v676, 7
  %v791 = vpop.permute.xlu0 %790
  %792 = vrot.lane.b32.xlu0 %v671, 7
  %v793 = vpop.permute.xlu0 %792
  %794 = vrot.lane.b32.xlu0 %v677, 7
  %v795 = vpop.permute.xlu0 %794
  %796 = vrot.lane.b32.xlu0 %v675, 7
  %v797 = vpop.permute.xlu0 %796
  %798 = vrot.lane.b32.xlu0 %v686, 7
  %v799 = vpop.permute.xlu0 %798
  %800 = vrot.lane.b32.xlu0 %v681, 7
  %v801 = vpop.permute.xlu0 %800
  %802 = vrot.lane.b32.xlu0 %v687, 7
  %v803 = vpop.permute.xlu0 %802
  %804 = vrot.lane.b32.xlu0 %v685, 7
  %v805 = vpop.permute.xlu0 %804
  %806 = vrot.lane.b32.xlu0 %v696, 7
  %v807 = vpop.permute.xlu0 %806
  %808 = vrot.lane.b32.xlu0 %v691, 7
  %v809 = vpop.permute.xlu0 %808
  %810 = vrot.lane.b32.xlu0 %v697, 7
  %v811 = vpop.permute.xlu0 %810
  %812 = vrot.lane.b32.xlu0 %v695, 7
  %v813 = vpop.permute.xlu0 %812
  %814 = vrot.lane.b32.xlu0 %v699, 7
  %v815 = vpop.permute.xlu0 %814
  %816 = vrot.lane.b32.xlu0 %v701, 7
  %v817 = vpop.permute.xlu0 %816
  %818 = vrot.lane.b32.xlu0 %v703, 7
  %v819 = vpop.permute.xlu0 %818
  %820 = vrot.lane.b32.xlu0 %v705, 7
  %v821 = vpop.permute.xlu0 %820
  %822 = vrot.lane.b32.xlu0 %v707, 7
  %v823 = vpop.permute.xlu0 %822
  %824 = vrot.lane.b32.xlu0 %v709, 7
  %v825 = vpop.permute.xlu0 %824
  %826 = vrot.lane.b32.xlu0 %v711, 7
  %v827 = vpop.permute.xlu0 %826
  %828 = vrot.lane.b32.xlu0 %v713, 7
  %v829 = vpop.permute.xlu0 %828
  %830 = vrot.lane.b32.xlu0 %v715, 7
  %v831 = vpop.permute.xlu0 %830
  %832 = vrot.lane.b32.xlu0 %v717, 7
  %v833 = vpop.permute.xlu0 %832
  %v834 = vsel %vm333, %v783, %v785
  %v835 = vsel %vm333, %v787, %v789
  %v836 = vsel %vm333, %v791, %v793
  %v837 = vsel %vm333, %v795, %v797
  %v838 = vsel %vm333, %v799, %v801
  %v839 = vsel %vm333, %v803, %v805
  %v840 = vsel %vm333, %v807, %v809
  %v841 = vsel %vm333, %v811, %v813
  %v861 = vsel %vm360, %v774, 0
  %v864 = vsel %vm360, %v777, 0
  %866 = vmatpush.bf16.msra.mxu0 %v841
  %867 = vmatpush.bf16.msra.mxu0 %v840
  %868 = vmatpush.bf16.msra.mxu0 %v839
  %869 = vmatpush.bf16.msra.mxu0 %v838
  %870 = vmatpush.bf16.msra.mxu0 %v837
  %871 = vmatpush.bf16.msra.mxu0 %v836
  %872 = vmatpush.bf16.msra.mxu0 %v835
  %873 = vmatpush.bf16.msra.mxu0 %v834
  %874 = vmatmul.bf16.gmra.mxu0 %v772
  %v875 = vpop.f32.mrf.mxu0
  %v876 = vadd.f32 %v735, %v875
  %v877 = vpop.f32.mrf.mxu0
  %v878 = vadd.f32 %v740, %v877
  %879 = vmatmul.bf16.gmra.mxu0 %v775
  %v880 = vpop.f32.mrf.mxu0
  %v881 = vadd.f32 %v745, %v880
  %v882 = vpop.f32.mrf.mxu0
  %v883 = vadd.f32 %v750, %v882
  %884 = vdwg.mxu0
  %885 = vmatpush.bf16.msra.mxu0 %v829
  %886 = vmatpush.bf16.msra.mxu0 %v827
  %887 = vmatpush.bf16.msra.mxu0 %v825
  %888 = vmatpush.bf16.msra.mxu0 %v823
  %889 = vmatpush.bf16.msra.mxu0 %v821
  %890 = vmatpush.bf16.msra.mxu0 %v819
  %891 = vmatpush.bf16.msra.mxu0 %v817
  %892 = vmatpush.bf16.msra.mxu0 %v815
  %893 = vmatmul.bf16.gmra.mxu0 %v773
  %v894 = vpop.f32.mrf.mxu0
  %v895 = vadd.f32 %v876, %v894
  %v896 = vpop.f32.mrf.mxu0
  %v897 = vadd.f32 %v878, %v896
  %898 = vmatmul.bf16.gmra.mxu0 %v776
  %v899 = vpop.f32.mrf.mxu0
  %v900 = vadd.f32 %v881, %v899
  %v901 = vpop.f32.mrf.mxu0
  %v902 = vadd.f32 %v883, %v901
  %903 = vdwg.mxu0
  %904 = vmatpush.bf16.msra.mxu0 0
  %905 = vmatpush.bf16.msra.mxu0 0
  %906 = vmatpush.bf16.msra.mxu0 0
  %907 = vmatpush.bf16.msra.mxu0 0
  %908 = vmatpush.bf16.msra.mxu0 0
  %909 = vmatpush.bf16.msra.mxu0 0
  %910 = vmatpush.bf16.msra.mxu0 %v833
  %911 = vmatpush.bf16.msra.mxu0 %v831
  %912 = vmatmul.bf16.gmra.mxu0 %v861
  %v913 = vpop.f32.mrf.mxu0
  %v914 = vadd.f32 %v895, %v913
  %v915 = vpop.f32.mrf.mxu0
  %v916 = vadd.f32 %v897, %v915
  %917 = vmatmul.bf16.gmra.mxu0 %v864
  %v918 = vpop.f32.mrf.mxu0
  %v919 = vadd.f32 %v900, %v918
  %v920 = vpop.f32.mrf.mxu0
  %v921 = vadd.f32 %v902, %v920
  %922 = vdwg.mxu0
  %v923 = vmax.f32 %v914, 0.0
  %v924 = vmax.f32 %v916, 0.0
  %v925 = vmax.f32 %v919, 0.0
  %v926 = vmax.f32 %v921, 0.0
  %s927 = scalar_lea.vmem %s6, 32
  %v928 = vld [vmem:[%s927] sm:$0xff]
  %v929 = vld [vmem:[%s927 + $0x8] sm:$0xff]
  %v930 = vld [vmem:[%s927 + $0x10] sm:$0xff]
  %v931 = vld [vmem:[%s927 + $0x18] sm:$0xff]
  %933 = vset.pattern.permute.xlu0 0
  %934 = vperm.xlu0 %933, %v928
  %v935 = vpop.permute.xlu0 %934
  %938 = vset.pattern.permute.xlu0 0
  %939 = vperm.xlu0 %938, %v929
  %v940 = vpop.permute.xlu0 %939
  %943 = vset.pattern.permute.xlu0 0
  %944 = vperm.xlu0 %943, %v930
  %v945 = vpop.permute.xlu0 %944
  %948 = vset.pattern.permute.xlu0 0
  %949 = vperm.xlu0 %948, %v931
  %v950 = vpop.permute.xlu0 %949
  %v952 = vmul.f32 %v923, %v935
  %v953 = vmul.f32 %v924, %v940
  %v954 = vmul.f32 %v925, %v945
  %v955 = vmul.f32 %v926, %v950
  %s956 = scalar_lea.vmem %s7, 32
  %v957 = vld [vmem:[%s956] sm:$0xff]
  %v958 = vld [vmem:[%s956 + $0x8] sm:$0xff]
  %v959 = vld [vmem:[%s956 + $0x10] sm:$0xff]
  %v960 = vld [vmem:[%s956 + $0x18] sm:$0xff]
  %962 = vset.pattern.permute.xlu0 0
  %963 = vperm.xlu0 %962, %v957
  %v964 = vpop.permute.xlu0 %963
  %967 = vset.pattern.permute.xlu0 0
  %968 = vperm.xlu0 %967, %v958
  %v969 = vpop.permute.xlu0 %968
  %972 = vset.pattern.permute.xlu0 0
  %973 = vperm.xlu0 %972, %v959
  %v974 = vpop.permute.xlu0 %973
  %977 = vset.pattern.permute.xlu0 0
  %978 = vperm.xlu0 %977, %v960
  %v979 = vpop.permute.xlu0 %978
  %v981 = vadd.f32 %v952, %v964
  %v982 = vadd.f32 %v953, %v969
  %v983 = vadd.f32 %v954, %v974
  %v984 = vadd.f32 %v955, %v979
  %v985 = vpack.c.bf16 %v982, %v981
  %v986 = vpack.c.bf16 %v984, %v983
  %s987 = scalar_lea.vmem %s8, 16
  %v988 = vld [vmem:[%s987] sm:$0xf]
  %v989 = vld [vmem:[%s987 + $0x4] sm:$0xf]
  %v990 = vld [vmem:[%s987 + $0x8] sm:$0xf]
  %v991 = vld [vmem:[%s987 + $0xc] sm:$0xf]
  %s992 = scalar_lea.vmem %s9, 32
  %v993 = vld [vmem:[%s992] sm:$0xff]
  %v994 = vld [vmem:[%s992 + $0x8] sm:$0xff]
  %v995 = vld [vmem:[%s992 + $0x10] sm:$0xff]
  %v996 = vld [vmem:[%s992 + $0x18] sm:$0xff]
  %998 = vset.pattern.permute.xlu0 0
  %999 = vperm.xlu0 %998, %v993
  %v1000 = vpop.permute.xlu0 %999
  %1003 = vset.pattern.permute.xlu0 0
  %1004 = vperm.xlu0 %1003, %v994
  %v1005 = vpop.permute.xlu0 %1004
  %1008 = vset.pattern.permute.xlu0 0
  %1009 = vperm.xlu0 %1008, %v995
  %v1010 = vpop.permute.xlu0 %1009
  %1013 = vset.pattern.permute.xlu0 0
  %1014 = vperm.xlu0 %1013, %v996
  %v1015 = vpop.permute.xlu0 %1014
  %v1021 = vunpack.c.l.b16 %v988
  %v1022 = vunpack.c.l.b16 %v989
  %v1023 = vunpack.c.l.b16 %v990
  %v1024 = vunpack.c.l.b16 %v991
  %v1025 = vpack.c.b16 %v1022, %v1021
  %v1026 = vpack.c.b16 %v1024, %v1023
  %v1028 = vsel %vm360, %v1025, 0
  %v1031 = vsel %vm360, %v1026, 0
  %1033 = vmatpush.bf16.msra.mxu0 0
  %1034 = vmatpush.bf16.msra.mxu0 0
  %1035 = vmatpush.bf16.msra.mxu0 0
  %1036 = vmatpush.bf16.msra.mxu0 0
  %1037 = vmatpush.bf16.msra.mxu0 0
  %1038 = vmatpush.bf16.msra.mxu0 0
  %1039 = vmatpush.bf16.msra.mxu0 %v986
  %1040 = vmatpush.bf16.msra.mxu0 %v985
  %1041 = vmatmul.bf16.gmra.mxu0 %v1028
  %v1042 = vpop.f32.mrf.mxu0
  %v1043 = vadd.f32 %v1000, %v1042
  %v1044 = vpop.f32.mrf.mxu0
  %v1045 = vadd.f32 %v1005, %v1044
  %1046 = vmatmul.bf16.gmra.mxu0 %v1031
  %v1047 = vpop.f32.mrf.mxu0
  %v1048 = vadd.f32 %v1010, %v1047
  %v1049 = vpop.f32.mrf.mxu0
  %v1050 = vadd.f32 %v1015, %v1049
  %1051 = vdwg.mxu0
  %v1052 = vadd.f32 %v559, %v1043
  %v1053 = vadd.f32 %v561, %v1045
  %v1054 = vadd.f32 %v563, %v1048
  %v1055 = vadd.f32 %v565, %v1050
  %1056 = vst.msk [vmem:[#allocation2 + $0x8] sm:$0xff] %vm553, %v1052
  %1057 = vst.msk [vmem:[#allocation2 + $0x18] sm:$0xff] %vm553, %v1053
  %1058 = vst.msk [vmem:[#allocation2 + $0x28] sm:$0xff] %vm553, %v1054
  %1059 = vst.msk [vmem:[#allocation2 + $0x38] sm:$0xff] %vm553, %v1055
  %v1060 = vld [vmem:[#allocation2 + $0x8] sm:$0xff]
  %v1061 = vld [vmem:[#allocation2 + $0x18] sm:$0xff]
  %v1062 = vld [vmem:[#allocation2 + $0x28] sm:$0xff]
  %v1063 = vld [vmem:[#allocation2 + $0x38] sm:$0xff]
  %1064 = vst.msk [vmem:[%s10] sm:$0xff] %vm553, %v1060
  %1065 = vst.msk [vmem:[%s10 + $0x8] sm:$0xff] %vm553, %v1061
  %1066 = vst.msk [vmem:[%s10 + $0x10] sm:$0xff] %vm553, %v1062
  %1067 = vst.msk [vmem:[%s10 + $0x18] sm:$0xff] %vm553, %v1063
  // Predicated region
  $region42: #{encoder_forward_pallas.7} parent=0 // pred_check
    _
  $region43: #{encoder_forward_pallas.7} parent=0 // pred_check_branch
    %1069 = sbr.rel (0) target = $region45
  $region44: #{encoder_forward_pallas.7} parent=0 // pred_region
    _
  $region45: #{encoder_forward_pallas.7} parent=0 // pred_fallthru
    _
  // Predicated region
  $region46: #{encoder_forward_pallas.7} parent=0 // pred_check
    _
  $region47: #{encoder_forward_pallas.7} parent=0 // pred_check_branch
    %1071 = sbr.rel (0) target = $region49
  $region48: #{encoder_forward_pallas.7} parent=0 // pred_region
    _
  $region49: #{encoder_forward_pallas.7} parent=0 // pred_fallthru
    _

</llo_original>
